<compile_context>
chip_gen: v7x
topology: tpu7x:2x2x1
jax: 0.10.0
libtpu: 0.0.40
codegen_flags: <defaults>
</compile_context>

<pallas_src>
import functools
import math

import jax
import jax.numpy as jnp
from jax.experimental import pallas as pl
from jax.experimental.pallas import tpu as pltpu

HIDDEN = 400      # logical hidden width (matches the PyTorch T module)
HPAD = 512        # 128-lane-aligned padded width used on-chip


def mine_kernel(x_ref, z_ref, zm_ref,
                w1x_ref, w1z_ref, b1_ref,
                w2_ref, b2_ref, w3_ref, b3_ref,
                w4_ref, b4_ref,
                sum_ref, max_ref, se_ref,
                *, batch, block_b):
    i = pl.program_id(0)

    # Inputs are already bf16 (cast once in the wrapper).
    xb = x_ref[...]
    zb = z_ref[...]
    zmb = zm_ref[...]

    # Layer-1 x-contribution computed once, shared by joint and marginal pairs.
    hx = jnp.dot(xb, w1x_ref[...], preferred_element_type=jnp.float32)
    hz_joint = jnp.dot(zb, w1z_ref[...], preferred_element_type=jnp.float32)
    hz_marg = jnp.dot(zmb, w1z_ref[...], preferred_element_type=jnp.float32)

    # Fused trunk: joint rows on top, marginal rows below -> ONE MXU matmul per
    # layer (instead of two) for the big 512x512 layers.
    pre1 = jnp.concatenate([hx + hz_joint, hx + hz_marg], axis=0)  # (2*tb, HPAD) f32
    h = jnp.maximum(pre1 + b1_ref[...], 0.0)
    h = jnp.maximum(
        jnp.dot(h.astype(jnp.bfloat16), w2_ref[...],
                preferred_element_type=jnp.float32) + b2_ref[...], 0.0)
    h = jnp.maximum(
        jnp.dot(h.astype(jnp.bfloat16), w3_ref[...],
                preferred_element_type=jnp.float32) + b3_ref[...], 0.0)
    # Final (HIDDEN -> 1) layer: VPU multiply + lane reduce (no N=1 MXU matmul).
    t_all = jnp.sum(h * w4_ref[...], axis=-1, keepdims=True) + b4_ref[...]  # (2*tb, 1)

    t_joint = t_all[:block_b]
    t_marg = t_all[block_b:]

    # Mask rows past the true batch size (batch is zero-padded to a tile multiple).
    row = jax.lax.broadcasted_iota(jnp.int32, (block_b, 1), 0) + i * block_b
    valid = row < batch

    # Per-tile partials; merged (stable logsumexp) in the wrapper. This keeps the
    # grid axis fully parallel (2 TCs on v7x) -- no carried scratch.
    sum_ref[...] = jnp.sum(jnp.where(valid, t_joint, 0.0), keepdims=True)

    tm = jnp.where(valid, t_marg, -1e30)   # sentinel stays in f32; exp(tm - m) -> 0
    m = jnp.max(tm, keepdims=True)
    se_ref[...] = jnp.sum(jnp.exp(tm - m), keepdims=True)
    max_ref[...] = m


def init_params(key, x_dim, z_dim):
    """PyTorch-style init: U(-1/sqrt(fan_in), 1/sqrt(fan_in)); weights are (in, out)."""
    dims = [(x_dim + z_dim, HIDDEN), (HIDDEN, HIDDEN), (HIDDEN, HIDDEN), (HIDDEN, 1)]
    params = []
    for fan_in, fan_out in dims:
        key, kw, kb = jax.random.split(key, 3)
        bound = 1.0 / math.sqrt(fan_in)
        w = jax.random.uniform(kw, (fan_in, fan_out), jnp.float32, -bound, bound)
        b = jax.random.uniform(kb, (1, fan_out), jnp.float32, -bound, bound)
        params += [w, b]
    return params


def prepare_params(params, x_dim):
    """Zero-pad HIDDEN 400->512 (results unchanged), split W1 into x/z parts,
    cast MXU weights to bf16 (biases and the final row stay f32).
    Call this ONCE and reuse the result (kept out of the per-step jitted path)."""
    w1, b1, w2, b2, w3, b3, w4, b4 = params
    ph = HPAD - w1.shape[1]
    w1p = jnp.pad(w1, ((0, 0), (0, ph)))
    w1x = w1p[:x_dim].astype(jnp.bfloat16)
    w1z = w1p[x_dim:].astype(jnp.bfloat16)
    b1p = jnp.pad(b1, ((0, 0), (0, ph)))
    w2p = jnp.pad(w2, ((0, ph), (0, ph))).astype(jnp.bfloat16)
    b2p = jnp.pad(b2, ((0, 0), (0, ph)))
    w3p = jnp.pad(w3, ((0, ph), (0, ph))).astype(jnp.bfloat16)
    b3p = jnp.pad(b3, ((0, 0), (0, ph)))
    w4row = jnp.pad(w4, ((0, ph), (0, 0))).T        # (1, HPAD), f32
    return (w1x, w1z, b1p, w2p, b2p, w3p, b3p, w4row, b4)


def mine_forward(x, z, z_marg, prepared):
    """Scalar MINE loss:  -mean(T(x,z)) + log(mean(exp(T(x,z_marg))))."""
    B, x_dim = x.shape
    z_dim = z.shape[1]

    # Batch tile: 512 rows (per review) amortizes the ~0.35us per-step overhead
    # and keeps activations (~<16 MiB at 2*tb rows) within v7x's scoped VMEM.
    tb = 512 if B >= 512 else -(-B // 8) * 8
    grid_b = pl.cdiv(B, tb)
    b_pad = grid_b * tb - B

    # bf16 cast + batch padding done once in the wrapper (halves input DMA bytes,
    # removes per-step VPU cast passes).
    xb = x.astype(jnp.bfloat16)
    zb = z.astype(jnp.bfloat16)
    zmb = z_marg.astype(jnp.bfloat16)
    if b_pad:
        xb = jnp.pad(xb, ((0, b_pad), (0, 0)))
        zb = jnp.pad(zb, ((0, b_pad), (0, 0)))
        zmb = jnp.pad(zmb, ((0, b_pad), (0, 0)))

    in_specs = [
        pl.BlockSpec((tb, x_dim), lambda i: (i, 0)),
        pl.BlockSpec((tb, z_dim), lambda i: (i, 0)),
        pl.BlockSpec((tb, z_dim), lambda i: (i, 0)),
    ] + [pl.BlockSpec(p.shape, lambda i: (0, 0)) for p in prepared]  # weights VMEM-resident

    part_shape = jax.ShapeDtypeStruct((grid_b, 1, 1), jnp.float32)
    part_spec = pl.BlockSpec((None, 1, 1), lambda i: (i, 0, 0))      # kernel sees (1,1)

    sums, maxs, ses = pl.pallas_call(
        functools.partial(mine_kernel, batch=B, block_b=tb),
        out_shape=(part_shape, part_shape, part_shape),
        grid=(grid_b,),
        in_specs=in_specs,
        out_specs=(part_spec, part_spec, part_spec),
        compiler_params=pltpu.CompilerParams(
            dimension_semantics=("parallel",),       # per-tile partials -> both TCs on v7x
            vmem_limit_bytes=48 * 1024 * 1024),
    )(xb, zb, zmb, *prepared)

    # Trivial merge of per-tile partials (stable logsumexp across tiles).
    t_mean = jnp.sum(sums) / B
    m = jnp.max(maxs)
    second = m + jnp.log(jnp.sum(ses * jnp.exp(maxs - m)) / B)
    return -t_mean + second


def reference_forward(x, z, z_marg, params):
    w1, b1, w2, b2, w3, b3, w4, b4 = params

    def T(a, c):
        h = jnp.concatenate([a, c], axis=1)
        h = jnp.maximum(h @ w1 + b1, 0.0)
        h = jnp.maximum(h @ w2 + b2, 0.0)
        h = jnp.maximum(h @ w3 + b3, 0.0)
        return h @ w4 + b4

    t = jnp.mean(T(x, z))
    t_marg = T(x, z_marg)
    second = jnp.log(jnp.mean(jnp.exp(t_marg)))
    return -t + second


if __name__ == "__main__":
    B, x_dim, z_dim = 8, 8, 8

    key = jax.random.PRNGKey(0)
    k_x, k_z, k_perm, k_p = jax.random.split(key, 4)

    x = jax.random.normal(k_x, (B, x_dim), jnp.float32)
    z = jax.random.normal(k_z, (B, z_dim), jnp.float32)
    # Mine.forward uses z[randperm(B)] when z_marg is None; deterministic perm here.
    z_marg = z[jax.random.permutation(k_perm, B)]

    params = init_params(k_p, x_dim, z_dim)
    prepared = prepare_params(params, x_dim)   # hoisted out of the per-call path

    loss = jax.jit(mine_forward)(x, z, z_marg, prepared)
    jax.block_until_ready(loss)

    ref = reference_forward(x, z, z_marg, params)
    # bf16 MXU operands/inputs -> small deviation from the pure-f32 reference.
    assert jnp.allclose(loss, ref, atol=3e-2, rtol=0.0), (loss, ref)

    print("KERNEL_OK")
</pallas_src>

<mosaic_0001>
module attributes {stable_mosaic.version = 11 : i64} {
  func.func @mine_kernel(%arg0: i32, %arg1: memref<8x8xbf16, #tpu.memory_space<vmem>>, %arg2: memref<8x8xbf16, #tpu.memory_space<vmem>>, %arg3: memref<8x8xbf16, #tpu.memory_space<vmem>>, %arg4: memref<8x512xbf16, #tpu.memory_space<vmem>>, %arg5: memref<8x512xbf16, #tpu.memory_space<vmem>>, %arg6: memref<1x512xf32, #tpu.memory_space<vmem>>, %arg7: memref<512x512xbf16, #tpu.memory_space<vmem>>, %arg8: memref<1x512xf32, #tpu.memory_space<vmem>>, %arg9: memref<512x512xbf16, #tpu.memory_space<vmem>>, %arg10: memref<1x512xf32, #tpu.memory_space<vmem>>, %arg11: memref<1x512xf32, #tpu.memory_space<vmem>>, %arg12: memref<1x1xf32, #tpu.memory_space<vmem>>, %arg13: memref<1x1x1xf32, #tpu.memory_space<vmem>>, %arg14: memref<1x1x1xf32, #tpu.memory_space<vmem>>, %arg15: memref<1x1x1xf32, #tpu.memory_space<vmem>>) attributes {dimension_semantics = [#tpu.dimension_semantics<parallel>], iteration_bounds = array<i64: 1>, scalar_prefetch = 0 : i64, scratch_operands = 0 : i64, tpu.core_type = #tpu.core_type<tc>, window_params = [{transform_indices = @transform_0, window_bounds = array<i64: 8, 8>}, {transform_indices = @transform_1, window_bounds = array<i64: 8, 8>}, {transform_indices = @transform_2, window_bounds = array<i64: 8, 8>}, {pipeline_mode = #tpu.pipeline_mode<synchronous>, transform_indices = @transform_3, window_bounds = array<i64: 8, 512>}, {pipeline_mode = #tpu.pipeline_mode<synchronous>, transform_indices = @transform_4, window_bounds = array<i64: 8, 512>}, {pipeline_mode = #tpu.pipeline_mode<synchronous>, transform_indices = @transform_5, window_bounds = array<i64: 1, 512>}, {pipeline_mode = #tpu.pipeline_mode<synchronous>, transform_indices = @transform_6, window_bounds = array<i64: 512, 512>}, {pipeline_mode = #tpu.pipeline_mode<synchronous>, transform_indices = @transform_7, window_bounds = array<i64: 1, 512>}, {pipeline_mode = #tpu.pipeline_mode<synchronous>, transform_indices = @transform_8, window_bounds = array<i64: 512, 512>}, {pipeline_mode = #tpu.pipeline_mode<synchronous>, transform_indices = @transform_9, window_bounds = array<i64: 1, 512>}, {pipeline_mode = #tpu.pipeline_mode<synchronous>, transform_indices = @transform_10, window_bounds = array<i64: 1, 512>}, {pipeline_mode = #tpu.pipeline_mode<synchronous>, transform_indices = @transform_11, window_bounds = array<i64: 1, 1>}, {transform_indices = @transform_12, window_bounds = array<i64: 1, 1, 1>}, {transform_indices = @transform_13, window_bounds = array<i64: 1, 1, 1>}, {transform_indices = @transform_14, window_bounds = array<i64: 1, 1, 1>}]} {
    %c0 = arith.constant 0 : index
    %c0_0 = arith.constant 0 : index
    %0 = vector.load %arg1[%c0, %c0_0] : memref<8x8xbf16, #tpu.memory_space<vmem>>, vector<8x8xbf16>
    %c0_1 = arith.constant 0 : index
    %c0_2 = arith.constant 0 : index
    %1 = vector.load %arg2[%c0_1, %c0_2] : memref<8x8xbf16, #tpu.memory_space<vmem>>, vector<8x8xbf16>
    %c0_3 = arith.constant 0 : index
    %c0_4 = arith.constant 0 : index
    %2 = vector.load %arg3[%c0_3, %c0_4] : memref<8x8xbf16, #tpu.memory_space<vmem>>, vector<8x8xbf16>
    %c0_5 = arith.constant 0 : index
    %c0_6 = arith.constant 0 : index
    %3 = vector.load %arg4[%c0_5, %c0_6] : memref<8x512xbf16, #tpu.memory_space<vmem>>, vector<8x512xbf16>
    %cst = arith.constant dense<0.000000e+00> : vector<8x512xf32>
    %4 = tpu.matmul %0, %3, %cst {dimension_numbers = #tpu.dot_dimension_numbers<[1], [0], [0], [1], [0, 0, 1, 1], [], []>} : vector<8x8xbf16>, vector<8x512xbf16>, vector<8x512xf32> -> vector<8x512xf32>
    %c0_7 = arith.constant 0 : index
    %c0_8 = arith.constant 0 : index
    %5 = vector.load %arg5[%c0_7, %c0_8] : memref<8x512xbf16, #tpu.memory_space<vmem>>, vector<8x512xbf16>
    %cst_9 = arith.constant dense<0.000000e+00> : vector<8x512xf32>
    %6 = tpu.matmul %1, %5, %cst_9 {dimension_numbers = #tpu.dot_dimension_numbers<[1], [0], [0], [1], [0, 0, 1, 1], [], []>} : vector<8x8xbf16>, vector<8x512xbf16>, vector<8x512xf32> -> vector<8x512xf32>
    %c0_10 = arith.constant 0 : index
    %c0_11 = arith.constant 0 : index
    %7 = vector.load %arg5[%c0_10, %c0_11] : memref<8x512xbf16, #tpu.memory_space<vmem>>, vector<8x512xbf16>
    %cst_12 = arith.constant dense<0.000000e+00> : vector<8x512xf32>
    %8 = tpu.matmul %2, %7, %cst_12 {dimension_numbers = #tpu.dot_dimension_numbers<[1], [0], [0], [1], [0, 0, 1, 1], [], []>} : vector<8x8xbf16>, vector<8x512xbf16>, vector<8x512xf32> -> vector<8x512xf32>
    %9 = arith.addf %4, %6 : vector<8x512xf32>
    %10 = arith.addf %4, %8 : vector<8x512xf32>
    %11 = tpu.concatenate %9, %10 in 0 : vector<8x512xf32>, vector<8x512xf32> -> vector<16x512xf32>
    %c0_13 = arith.constant 0 : index
    %c0_14 = arith.constant 0 : index
    %12 = vector.load %arg6[%c0_13, %c0_14] : memref<1x512xf32, #tpu.memory_space<vmem>>, vector<1x512xf32>
    %13 = vector.broadcast %12 : vector<1x512xf32> to vector<16x512xf32>
    %14 = arith.addf %11, %13 : vector<16x512xf32>
    %cst_15 = arith.constant 0.000000e+00 : f32
    %15 = vector.broadcast %cst_15 : f32 to vector<16x512xf32>
    %16 = arith.maximumf %14, %15 : vector<16x512xf32>
    %17 = arith.truncf %16 : vector<16x512xf32> to vector<16x512xbf16>
    %c0_16 = arith.constant 0 : index
    %c0_17 = arith.constant 0 : index
    %18 = vector.load %arg7[%c0_16, %c0_17] : memref<512x512xbf16, #tpu.memory_space<vmem>>, vector<512x512xbf16>
    %cst_18 = arith.constant dense<0.000000e+00> : vector<16x512xf32>
    %19 = tpu.matmul %17, %18, %cst_18 {dimension_numbers = #tpu.dot_dimension_numbers<[1], [0], [0], [1], [0, 0, 1, 1], [], []>} : vector<16x512xbf16>, vector<512x512xbf16>, vector<16x512xf32> -> vector<16x512xf32>
    %c0_19 = arith.constant 0 : index
    %c0_20 = arith.constant 0 : index
    %20 = vector.load %arg8[%c0_19, %c0_20] : memref<1x512xf32, #tpu.memory_space<vmem>>, vector<1x512xf32>
    %21 = vector.broadcast %20 : vector<1x512xf32> to vector<16x512xf32>
    %22 = arith.addf %19, %21 : vector<16x512xf32>
    %cst_21 = arith.constant 0.000000e+00 : f32
    %23 = vector.broadcast %cst_21 : f32 to vector<16x512xf32>
    %24 = arith.maximumf %22, %23 : vector<16x512xf32>
    %25 = arith.truncf %24 : vector<16x512xf32> to vector<16x512xbf16>
    %c0_22 = arith.constant 0 : index
    %c0_23 = arith.constant 0 : index
    %26 = vector.load %arg9[%c0_22, %c0_23] : memref<512x512xbf16, #tpu.memory_space<vmem>>, vector<512x512xbf16>
    %cst_24 = arith.constant dense<0.000000e+00> : vector<16x512xf32>
    %27 = tpu.matmul %25, %26, %cst_24 {dimension_numbers = #tpu.dot_dimension_numbers<[1], [0], [0], [1], [0, 0, 1, 1], [], []>} : vector<16x512xbf16>, vector<512x512xbf16>, vector<16x512xf32> -> vector<16x512xf32>
    %c0_25 = arith.constant 0 : index
    %c0_26 = arith.constant 0 : index
    %28 = vector.load %arg10[%c0_25, %c0_26] : memref<1x512xf32, #tpu.memory_space<vmem>>, vector<1x512xf32>
    %29 = vector.broadcast %28 : vector<1x512xf32> to vector<16x512xf32>
    %30 = arith.addf %27, %29 : vector<16x512xf32>
    %cst_27 = arith.constant 0.000000e+00 : f32
    %31 = vector.broadcast %cst_27 : f32 to vector<16x512xf32>
    %32 = arith.maximumf %30, %31 : vector<16x512xf32>
    %c0_28 = arith.constant 0 : index
    %c0_29 = arith.constant 0 : index
    %33 = vector.load %arg11[%c0_28, %c0_29] : memref<1x512xf32, #tpu.memory_space<vmem>>, vector<1x512xf32>
    %34 = vector.broadcast %33 : vector<1x512xf32> to vector<16x512xf32>
    %35 = arith.mulf %32, %34 : vector<16x512xf32>
    %cst_30 = arith.constant dense<0.000000e+00> : vector<16xf32>
    %36 = vector.multi_reduction <add>, %35, %cst_30 [1] : vector<16x512xf32> to vector<16xf32>
    %37 = vector.shape_cast %36 : vector<16xf32> to vector<16x1xf32>
    %c0_31 = arith.constant 0 : index
    %c0_32 = arith.constant 0 : index
    %38 = vector.load %arg12[%c0_31, %c0_32] : memref<1x1xf32, #tpu.memory_space<vmem>>, vector<1x1xf32>
    %39 = vector.broadcast %38 : vector<1x1xf32> to vector<16x1xf32>
    %40 = arith.addf %37, %39 : vector<16x1xf32>
    %41 = vector.extract_strided_slice %40 {offsets = [0, 0], sizes = [8, 1], strides = [1, 1]} : vector<16x1xf32> to vector<8x1xf32>
    %42 = vector.extract_strided_slice %40 {offsets = [8, 0], sizes = [8, 1], strides = [1, 1]} : vector<16x1xf32> to vector<8x1xf32>
    %43 = tpu.iota {dimensions = array<i32: 0>} : vector<8x1xi32>
    %c8_i32 = arith.constant 8 : i32
    %44 = arith.muli %arg0, %c8_i32 : i32
    %45 = vector.broadcast %44 : i32 to vector<8x1xi32>
    %46 = arith.addi %43, %45 : vector<8x1xi32>
    %c8_i32_33 = arith.constant 8 : i32
    %47 = vector.broadcast %c8_i32_33 : i32 to vector<8x1xi32>
    %48 = arith.cmpi slt, %46, %47 : vector<8x1xi32>
    %cst_34 = arith.constant 0.000000e+00 : f32
    %49 = vector.broadcast %cst_34 : f32 to vector<8x1xf32>
    %50 = arith.select %48, %41, %49 : vector<8x1xi1>, vector<8x1xf32>
    %51 = vector.shape_cast %50 : vector<8x1xf32> to vector<1x8x1xf32>
    %cst_35 = arith.constant dense<0.000000e+00> : vector<1xf32>
    %52 = vector.multi_reduction <add>, %51, %cst_35 [1, 2] : vector<1x8x1xf32> to vector<1xf32>
    %53 = vector.shape_cast %52 : vector<1xf32> to vector<1x1x1xf32>
    %54 = vector.extract %53[0, 0, 0] : f32 from vector<1x1x1xf32>
    %55 = vector.broadcast %54 : f32 to vector<1x1xf32>
    %c0_36 = arith.constant 0 : index
    %c0_37 = arith.constant 0 : index
    %c0_38 = arith.constant 0 : index
    %56 = vector.load %arg13[%c0_36, %c0_37, %c0_38] : memref<1x1x1xf32, #tpu.memory_space<vmem>>, vector<1x1x1xf32>
    %57 = vector.shape_cast %56 : vector<1x1x1xf32> to vector<1x1xf32>
    %58 = vector.shape_cast %55 : vector<1x1xf32> to vector<1x1x1xf32>
    tpu.vector_store %arg13[%c0_36, %c0_37, %c0_38], %58 {strides = array<i32>} : memref<1x1x1xf32, #tpu.memory_space<vmem>>, vector<1x1x1xf32>,
    %cst_39 = arith.constant -1.000000e+30 : f32
    %59 = vector.broadcast %cst_39 : f32 to vector<8x1xf32>
    %60 = arith.select %48, %42, %59 : vector<8x1xi1>, vector<8x1xf32>
    %61 = vector.shape_cast %60 : vector<8x1xf32> to vector<1x8x1xf32>
    %cst_40 = arith.constant dense<0xFF800000> : vector<1xf32>
    %62 = vector.multi_reduction <maximumf>, %61, %cst_40 [1, 2] : vector<1x8x1xf32> to vector<1xf32>
    %63 = vector.shape_cast %62 : vector<1xf32> to vector<1x1x1xf32>
    %64 = vector.extract %63[0, 0, 0] : f32 from vector<1x1x1xf32>
    %65 = vector.broadcast %64 : f32 to vector<1x1xf32>
    %66 = vector.broadcast %65 : vector<1x1xf32> to vector<8x1xf32>
    %67 = arith.subf %60, %66 : vector<8x1xf32>
    %68 = math.exp %67 : vector<8x1xf32>
    %69 = vector.shape_cast %68 : vector<8x1xf32> to vector<1x8x1xf32>
    %cst_41 = arith.constant dense<0.000000e+00> : vector<1xf32>
    %70 = vector.multi_reduction <add>, %69, %cst_41 [1, 2] : vector<1x8x1xf32> to vector<1xf32>
    %71 = vector.shape_cast %70 : vector<1xf32> to vector<1x1x1xf32>
    %72 = vector.extract %71[0, 0, 0] : f32 from vector<1x1x1xf32>
    %73 = vector.broadcast %72 : f32 to vector<1x1xf32>
    %c0_42 = arith.constant 0 : index
    %c0_43 = arith.constant 0 : index
    %c0_44 = arith.constant 0 : index
    %74 = vector.load %arg15[%c0_42, %c0_43, %c0_44] : memref<1x1x1xf32, #tpu.memory_space<vmem>>, vector<1x1x1xf32>
    %75 = vector.shape_cast %74 : vector<1x1x1xf32> to vector<1x1xf32>
    %76 = vector.shape_cast %73 : vector<1x1xf32> to vector<1x1x1xf32>
    tpu.vector_store %arg15[%c0_42, %c0_43, %c0_44], %76 {strides = array<i32>} : memref<1x1x1xf32, #tpu.memory_space<vmem>>, vector<1x1x1xf32>,
    %c0_45 = arith.constant 0 : index
    %c0_46 = arith.constant 0 : index
    %c0_47 = arith.constant 0 : index
    %77 = vector.load %arg14[%c0_45, %c0_46, %c0_47] : memref<1x1x1xf32, #tpu.memory_space<vmem>>, vector<1x1x1xf32>
    %78 = vector.shape_cast %77 : vector<1x1x1xf32> to vector<1x1xf32>
    %79 = vector.shape_cast %65 : vector<1x1xf32> to vector<1x1x1xf32>
    tpu.vector_store %arg14[%c0_45, %c0_46, %c0_47], %79 {strides = array<i32>} : memref<1x1x1xf32, #tpu.memory_space<vmem>>, vector<1x1x1xf32>,
    return
  }
  func.func @transform_0(%arg0: i32) -> (i32, i32) {
    %c0_i32 = arith.constant 0 : i32
    %c0_i32_0 = arith.constant 0 : i32
    return %arg0, %c0_i32 : i32, i32
  }
  func.func @transform_1(%arg0: i32) -> (i32, i32) {
    %c0_i32 = arith.constant 0 : i32
    %c0_i32_0 = arith.constant 0 : i32
    return %arg0, %c0_i32 : i32, i32
  }
  func.func @transform_2(%arg0: i32) -> (i32, i32) {
    %c0_i32 = arith.constant 0 : i32
    %c0_i32_0 = arith.constant 0 : i32
    return %arg0, %c0_i32 : i32, i32
  }
  func.func @transform_3(%arg0: i32) -> (i32, i32) {
    %c0_i32 = arith.constant 0 : i32
    %c0_i32_0 = arith.constant 0 : i32
    %c0_i32_1 = arith.constant 0 : i32
    return %c0_i32, %c0_i32_0 : i32, i32
  }
  func.func @transform_4(%arg0: i32) -> (i32, i32) {
    %c0_i32 = arith.constant 0 : i32
    %c0_i32_0 = arith.constant 0 : i32
    %c0_i32_1 = arith.constant 0 : i32
    return %c0_i32, %c0_i32_0 : i32, i32
  }
  func.func @transform_5(%arg0: i32) -> (i32, i32) {
    %c0_i32 = arith.constant 0 : i32
    %c0_i32_0 = arith.constant 0 : i32
    %c0_i32_1 = arith.constant 0 : i32
    return %c0_i32, %c0_i32_0 : i32, i32
  }
  func.func @transform_6(%arg0: i32) -> (i32, i32) {
    %c0_i32 = arith.constant 0 : i32
    %c0_i32_0 = arith.constant 0 : i32
    %c0_i32_1 = arith.constant 0 : i32
    return %c0_i32, %c0_i32_0 : i32, i32
  }
  func.func @transform_7(%arg0: i32) -> (i32, i32) {
    %c0_i32 = arith.constant 0 : i32
    %c0_i32_0 = arith.constant 0 : i32
    %c0_i32_1 = arith.constant 0 : i32
    return %c0_i32, %c0_i32_0 : i32, i32
  }
  func.func @transform_8(%arg0: i32) -> (i32, i32) {
    %c0_i32 = arith.constant 0 : i32
    %c0_i32_0 = arith.constant 0 : i32
    %c0_i32_1 = arith.constant 0 : i32
    return %c0_i32, %c0_i32_0 : i32, i32
  }
  func.func @transform_9(%arg0: i32) -> (i32, i32) {
    %c0_i32 = arith.constant 0 : i32
    %c0_i32_0 = arith.constant 0 : i32
    %c0_i32_1 = arith.constant 0 : i32
    return %c0_i32, %c0_i32_0 : i32, i32
  }
  func.func @transform_10(%arg0: i32) -> (i32, i32) {
    %c0_i32 = arith.constant 0 : i32
    %c0_i32_0 = arith.constant 0 : i32
    %c0_i32_1 = arith.constant 0 : i32
    return %c0_i32, %c0_i32_0 : i32, i32
  }
  func.func @transform_11(%arg0: i32) -> (i32, i32) {
    %c0_i32 = arith.constant 0 : i32
    %c0_i32_0 = arith.constant 0 : i32
    %c0_i32_1 = arith.constant 0 : i32
    return %c0_i32, %c0_i32_0 : i32, i32
  }
  func.func @transform_12(%arg0: i32) -> (i32, i32, i32) {
    %c0_i32 = arith.constant 0 : i32
    %c0_i32_0 = arith.constant 0 : i32
    %c0_i32_1 = arith.constant 0 : i32
    return %arg0, %c0_i32, %c0_i32_0 : i32, i32, i32
  }
  func.func @transform_13(%arg0: i32) -> (i32, i32, i32) {
    %c0_i32 = arith.constant 0 : i32
    %c0_i32_0 = arith.constant 0 : i32
    %c0_i32_1 = arith.constant 0 : i32
    return %arg0, %c0_i32, %c0_i32_0 : i32, i32, i32
  }
  func.func @transform_14(%arg0: i32) -> (i32, i32, i32) {
    %c0_i32 = arith.constant 0 : i32
    %c0_i32_0 = arith.constant 0 : i32
    %c0_i32_1 = arith.constant 0 : i32
    return %arg0, %c0_i32, %c0_i32_0 : i32, i32, i32
  }
}

</mosaic_0001>

<llo_original>
// kernel: mine_forward.1
$region0: #{mine_forward.1}
  #allocation0 [shape = 'u32[]', space=smem, size = 0x4, offset = 0x4, fixed_abs, tag = 'smem constant byte address 0x4 - core index']
  #allocation1 [shape = 'u32[144,128]{1,0:T(1,128)}', space=vmem, size = 0x12000, scoped, tag = 'internal scratch']
  #allocation2 [shape = 'f32[1,1]{1,0:T(1,128)S(1)}', space=vmem, size = 0x200, scoped, tag = 'scoped memory for mine_forward.1']
  %s0 = inlined_call_operand.vmem [shape: bf16[8,8], index: 0, kind: input, shape index: {}]
  %s1 = inlined_call_operand.vmem [shape: bf16[8,8], index: 1, kind: input, shape index: {}]
  %s2 = inlined_call_operand.vmem [shape: bf16[8,8], index: 2, kind: input, shape index: {}]
  %s3 = inlined_call_operand.vmem [shape: bf16[8,512], index: 3, kind: input, shape index: {}]
  %s4 = inlined_call_operand.vmem [shape: bf16[8,512], index: 4, kind: input, shape index: {}]
  %s5 = inlined_call_operand.vmem [shape: f32[1,512], index: 5, kind: input, shape index: {}]
  %s6 = inlined_call_operand.hbm [shape: bf16[512,512], index: 6, kind: input, shape index: {}]
  %s7 = inlined_call_operand.vmem [shape: f32[1,512], index: 7, kind: input, shape index: {}]
  %s8 = inlined_call_operand.hbm [shape: bf16[512,512], index: 8, kind: input, shape index: {}]
  %s9 = inlined_call_operand.vmem [shape: f32[1,512], index: 9, kind: input, shape index: {}]
  %s10 = inlined_call_operand.vmem [shape: f32[1,512], index: 10, kind: input, shape index: {}]
  %s11 = inlined_call_operand.<no memory space> [shape: f32[1,1], index: 11, kind: input, shape index: {}]
  %s12 = inlined_call_operand.hbm [shape: f32[1,1,1], index: 12, kind: output, shape index: {0}]
  %s13 = inlined_call_operand.hbm [shape: f32[1,1,1], index: 13, kind: output, shape index: {1}]
  %s14 = inlined_call_operand.hbm [shape: f32[1,1,1], index: 14, kind: output, shape index: {2}]
  %15 = xla_tuple %s12, %s13, %s14
  %s16 = sld [smem:[#allocation0]]
  $region82: #{mine_forward.1} parent=0
    _
  %s18 = ssub.s32 1, %s16
  %s19 = scalar_select 0, %s18, %s16
  %v20 = vstv %s11
  %21 = vst [vmem:[#allocation2] sm:$0x1] %v20
  $region1: #{mine_forward.1} parent=0
    #allocation3 [shape = 'u8[524288]{0}', space=vmem, size = 0x80000, scoped, tag = 'input window, operand 6, single buffered']
    #allocation4 [shape = 's32[1]{0}', space=sflag, size = 0x4, scoped, tag = 'scoped memory for mine_forward.1']
    #allocation5 [shape = 's32[1]{0}', space=sflag, size = 0x4, scoped, tag = 'scoped memory for mine_forward.1']
    #allocation6 [shape = 'u8[524288]{0}', space=vmem, size = 0x80000, scoped, tag = 'input window, operand 8, single buffered']
    #allocation7 [shape = 's32[1]{0}', space=sflag, size = 0x4, scoped, tag = 'scoped memory for mine_forward.1']
    #allocation8 [shape = 'u8[512]{0}', space=vmem, size = 0x400, scoped, tag = 'output window, operand 0, single buffered']
    #allocation9 [shape = 'u8[512]{0}', space=vmem, size = 0x400, scoped, tag = 'output window, operand 1, single buffered']
    #allocation10 [shape = 's32[1]{0}', space=sflag, size = 0x4, scoped, tag = 'scoped memory for mine_forward.1']
    #allocation11 [shape = 'u8[512]{0}', space=vmem, size = 0x400, scoped, tag = 'output window, operand 2, single buffered']
    %22 = vsyncpa [#allocation4], 0
    %23 = vsyncpa [#allocation7], 0
    %24 = vsyncpa [#allocation5], 0
    %25 = vsyncpa [#allocation10], 0
    // Predicated region
    $region2: #{mine_forward.1} parent=1 // pred_check
      _
    $region3: #{mine_forward.1} parent=1 // pred_check_branch
      %27 = sbr.rel (0) target = $region5
    $region4: #{mine_forward.1} parent=1 // pred_region
      _
    $region5: #{mine_forward.1} parent=1 // pred_fallthru
      _
    // Predicated region
    $region6: #{mine_forward.1} parent=1 // pred_check
      _
    $region7: #{mine_forward.1} parent=1 // pred_check_branch
      %29 = sbr.rel (0) target = $region9
    $region8: #{mine_forward.1} parent=1 // pred_region
      _
    $region9: #{mine_forward.1} parent=1 // pred_fallthru
      _
    // Predicated region
    $region10: #{mine_forward.1} parent=1 // pred_check
      _
    $region11: #{mine_forward.1} parent=1 // pred_check_branch
      %31 = sbr.rel (0) target = $region13
    $region12: #{mine_forward.1} parent=1 // pred_region
      _
    $region13: #{mine_forward.1} parent=1 // pred_fallthru
      _
    // Predicated region
    $region14: #{mine_forward.1} parent=1 // pred_check
      _
    $region15: #{mine_forward.1} parent=1 // pred_check_branch
      %33 = sbr.rel (0) target = $region17
    $region16: #{mine_forward.1} parent=1 // pred_region
      _
    $region17: #{mine_forward.1} parent=1 // pred_fallthru
      _
    // Predicated region
    $region18: #{mine_forward.1} parent=1 // pred_check
      _
    $region19: #{mine_forward.1} parent=1 // pred_check_branch
      %35 = sbr.rel (0) target = $region21
    $region20: #{mine_forward.1} parent=1 // pred_region
      _
    $region21: #{mine_forward.1} parent=1 // pred_fallthru
      _
    // Predicated region
    $region22: #{mine_forward.1} parent=1 // pred_check
      _
    $region23: #{mine_forward.1} parent=1 // pred_check_branch
      %37 = sbr.rel (0) target = $region25
    $region24: #{mine_forward.1} parent=1 // pred_region
      _
    $region25: #{mine_forward.1} parent=1 // pred_fallthru
      _
    // Predicated region
    $region26: #{mine_forward.1} parent=1 // pred_check
      _
    $region27: #{mine_forward.1} parent=1 // pred_check_branch
      %39 = sbr.rel (0) target = $region29
    $region28: #{mine_forward.1} parent=1 // pred_region
      %s41 = ssub.s32 16384, 16384
      %42 = vsyncadd [#allocation4], %s41
      %s43 = sshll.u32 [#allocation3], 4
      %s44 = int_to_ptr.vmem [resolvable:$true] %s43
      %49 = dma.hbm_to_vmem [thread:$0]  %s6, 16384, %s44, [#allocation4], 256, 256, 16
    $region29: #{mine_forward.1} parent=1 // pred_fallthru
      _
    // Predicated region
    $region30: #{mine_forward.1} parent=1 // pred_check
      _
    $region31: #{mine_forward.1} parent=1 // pred_check_branch
      %51 = sbr.rel (0) target = $region33
    $region32: #{mine_forward.1} parent=1 // pred_region
      _
    $region33: #{mine_forward.1} parent=1 // pred_fallthru
      _
    // Predicated region
    $region34: #{mine_forward.1} parent=1 // pred_check
      _
    $region35: #{mine_forward.1} parent=1 // pred_check_branch
      %53 = sbr.rel (0) target = $region37
    $region36: #{mine_forward.1} parent=1 // pred_region
      %s55 = ssub.s32 16384, 16384
      %56 = vsyncadd [#allocation7], %s55
      %s57 = sshll.u32 [#allocation6], 4
      %s58 = int_to_ptr.vmem [resolvable:$true] %s57
      %63 = dma.hbm_to_vmem [thread:$0]  %s8, 16384, %s58, [#allocation7], 256, 256, 16
    $region37: #{mine_forward.1} parent=1 // pred_fallthru
      _
    // Predicated region
    $region38: #{mine_forward.1} parent=1 // pred_check
      _
    $region39: #{mine_forward.1} parent=1 // pred_check_branch
      %65 = sbr.rel (0) target = $region41
    $region40: #{mine_forward.1} parent=1 // pred_region
      _
    $region41: #{mine_forward.1} parent=1 // pred_fallthru
      _
    // Predicated region
    $region42: #{mine_forward.1} parent=1 // pred_check
      _
    $region43: #{mine_forward.1} parent=1 // pred_check_branch
      %67 = sbr.rel (0) target = $region45
    $region44: #{mine_forward.1} parent=1 // pred_region
      _
    $region45: #{mine_forward.1} parent=1 // pred_fallthru
      _
    // Predicated region
    $region46: #{mine_forward.1} parent=1 // pred_check
      _
    $region47: #{mine_forward.1} parent=1 // pred_check_branch
      %69 = sbr.rel (0) target = $region49
    $region48: #{mine_forward.1} parent=1 // pred_region
      _
    $region49: #{mine_forward.1} parent=1 // pred_fallthru
      _
    // Predicated region
    $region50: #{mine_forward.1} parent=1 // pred_check
      _
    $region51: #{mine_forward.1} parent=1 // pred_check_branch
      %71 = sbr.rel (0) target = $region53
    $region52: #{mine_forward.1} parent=1 // pred_region
      %72 = dma.done [#allocation4], 16384
    $region53: #{mine_forward.1} parent=1 // pred_fallthru
      _
    // Predicated region
    $region54: #{mine_forward.1} parent=1 // pred_check
      _
    $region55: #{mine_forward.1} parent=1 // pred_check_branch
      %74 = sbr.rel (0) target = $region57
    $region56: #{mine_forward.1} parent=1 // pred_region
      %75 = dma.done [#allocation7], 16384
    $region57: #{mine_forward.1} parent=1 // pred_fallthru
      _
    %v77 = vld [vmem:[%s0] sm:$0xf]
    %v78 = vld [vmem:[%s1] sm:$0xf]
    %v79 = vld [vmem:[%s2] sm:$0xf]
    %v80 = vld [vmem:[%s3] sm:$0xff]
    %v81 = vld [vmem:[%s3 + $0x8] sm:$0xff]
    %v84 = vunpack.c.l.b16 %v80
    %v85 = vunpack.c.h.b16 %v80
    %v86 = vunpack.c.l.b16 %v81
    %v87 = vunpack.c.h.b16 %v81
    %v88 = vpack.c.b16 %v84, %v84
    %v89 = vpack.c.b16 %v85, %v85
    %v90 = vpack.c.b16 %v86, %v86
    %v91 = vpack.c.b16 %v87, %v87
    %vm92 = vcmask 64512
    %v94 = vsel %vm92, %v77, 0
    %vm96 = vcmask 1043456
    %v98 = vsel %vm96, %v88, 0
    %v101 = vsel %vm96, %v89, 0
    %v104 = vsel %vm96, %v90, 0
    %v107 = vsel %vm96, %v91, 0
    %109 = vmatprep.subr.bf16.mxu0 %v101
    %110 = vmatpush1.bf16.msra.mxu0 %v98
    %111 = vmatprep.subr.bf16.mxu0 0
    %112 = vmatpush1.bf16.msra.mxu0 0
    %113 = vmatprep.subr.bf16.mxu0 0
    %114 = vmatpush1.bf16.msra.mxu0 0
    %115 = vmatprep.subr.bf16.mxu0 0
    %116 = vmatpush1.bf16.msra.mxu0 0
    %117 = vmatprep.subr.bf16.mxu0 0
    %118 = vmatpush1.bf16.msra.mxu0 0
    %119 = vmatprep.subr.bf16.mxu0 0
    %120 = vmatpush1.bf16.msra.mxu0 0
    %121 = vmatprep.subr.bf16.mxu0 0
    %122 = vmatpush1.bf16.msra.mxu0 0
    %123 = vmatprep.subr.bf16.mxu0 0
    %124 = vmatpush1.bf16.msra.mxu0 0
    %125 = vmatprep.subr.bf16.mxu0 0
    %126 = vmatpush1.bf16.msra.mxu0 0
    %127 = vmatprep.subr.bf16.mxu0 0
    %128 = vmatpush1.bf16.msra.mxu0 0
    %129 = vmatprep.subr.bf16.mxu0 0
    %130 = vmatpush1.bf16.msra.mxu0 0
    %131 = vmatprep.subr.bf16.mxu0 0
    %132 = vmatpush1.bf16.msra.mxu0 0
    %133 = vmatprep.subr.bf16.mxu0 0
    %134 = vmatpush1.bf16.msra.mxu0 0
    %135 = vmatprep.subr.bf16.mxu0 0
    %136 = vmatpush1.bf16.msra.mxu0 0
    %137 = vmatprep.subr.bf16.mxu0 0
    %138 = vmatpush1.bf16.msra.mxu0 0
    %139 = vmatprep.subr.bf16.mxu0 0
    %140 = vmatpush1.bf16.msra.mxu0 0
    %141 = vmatprep.mubr.bf16.mxu0 0
    %142 = vmatmul.mubr.bf16.gmra.mrb[0].mxu0 %v94
    %v143 = vpop.f32.mrb[0].mxu0
    %v144 = vadd.f32 0.0, %v143
    %v145 = vpop.f32.mrb[0].mxu0
    %v146 = vadd.f32 0.0, %v145
    %v147 = vpop.f32.mrb[0].mxu0
    %v148 = vpop.f32.mrb[0].mxu0
    %149 = vdwg.mxu0
    %150 = vmatprep.subr.bf16.mxu0 %v107
    %151 = vmatpush1.bf16.msra.mxu0 %v104
    %152 = vmatprep.subr.bf16.mxu0 0
    %153 = vmatpush1.bf16.msra.mxu0 0
    %154 = vmatprep.subr.bf16.mxu0 0
    %155 = vmatpush1.bf16.msra.mxu0 0
    %156 = vmatprep.subr.bf16.mxu0 0
    %157 = vmatpush1.bf16.msra.mxu0 0
    %158 = vmatprep.subr.bf16.mxu0 0
    %159 = vmatpush1.bf16.msra.mxu0 0
    %160 = vmatprep.subr.bf16.mxu0 0
    %161 = vmatpush1.bf16.msra.mxu0 0
    %162 = vmatprep.subr.bf16.mxu0 0
    %163 = vmatpush1.bf16.msra.mxu0 0
    %164 = vmatprep.subr.bf16.mxu0 0
    %165 = vmatpush1.bf16.msra.mxu0 0
    %166 = vmatprep.subr.bf16.mxu0 0
    %167 = vmatpush1.bf16.msra.mxu0 0
    %168 = vmatprep.subr.bf16.mxu0 0
    %169 = vmatpush1.bf16.msra.mxu0 0
    %170 = vmatprep.subr.bf16.mxu0 0
    %171 = vmatpush1.bf16.msra.mxu0 0
    %172 = vmatprep.subr.bf16.mxu0 0
    %173 = vmatpush1.bf16.msra.mxu0 0
    %174 = vmatprep.subr.bf16.mxu0 0
    %175 = vmatpush1.bf16.msra.mxu0 0
    %176 = vmatprep.subr.bf16.mxu0 0
    %177 = vmatpush1.bf16.msra.mxu0 0
    %178 = vmatprep.subr.bf16.mxu0 0
    %179 = vmatpush1.bf16.msra.mxu0 0
    %180 = vmatprep.subr.bf16.mxu0 0
    %181 = vmatpush1.bf16.msra.mxu0 0
    %182 = vmatprep.mubr.bf16.mxu0 0
    %183 = vmatmul.mubr.bf16.gmra.mrb[0].mxu0 %v94
    %v184 = vpop.f32.mrb[0].mxu0
    %v185 = vadd.f32 0.0, %v184
    %v186 = vpop.f32.mrb[0].mxu0
    %v187 = vadd.f32 0.0, %v186
    %v188 = vpop.f32.mrb[0].mxu0
    %v189 = vpop.f32.mrb[0].mxu0
    %190 = vdwg.mxu0
    %v191 = vld [vmem:[%s4] sm:$0xff]
    %v192 = vld [vmem:[%s4 + $0x8] sm:$0xff]
    %v195 = vunpack.c.l.b16 %v191
    %v196 = vunpack.c.h.b16 %v191
    %v197 = vunpack.c.l.b16 %v192
    %v198 = vunpack.c.h.b16 %v192
    %v199 = vpack.c.b16 %v195, %v195
    %v200 = vpack.c.b16 %v196, %v196
    %v201 = vpack.c.b16 %v197, %v197
    %v202 = vpack.c.b16 %v198, %v198
    %v204 = vsel %vm92, %v78, 0
    %v207 = vsel %vm96, %v199, 0
    %v210 = vsel %vm96, %v200, 0
    %v213 = vsel %vm96, %v201, 0
    %v216 = vsel %vm96, %v202, 0
    %218 = vmatprep.subr.bf16.mxu0 %v210
    %219 = vmatpush1.bf16.msra.mxu0 %v207
    %220 = vmatprep.subr.bf16.mxu0 0
    %221 = vmatpush1.bf16.msra.mxu0 0
    %222 = vmatprep.subr.bf16.mxu0 0
    %223 = vmatpush1.bf16.msra.mxu0 0
    %224 = vmatprep.subr.bf16.mxu0 0
    %225 = vmatpush1.bf16.msra.mxu0 0
    %226 = vmatprep.subr.bf16.mxu0 0
    %227 = vmatpush1.bf16.msra.mxu0 0
    %228 = vmatprep.subr.bf16.mxu0 0
    %229 = vmatpush1.bf16.msra.mxu0 0
    %230 = vmatprep.subr.bf16.mxu0 0
    %231 = vmatpush1.bf16.msra.mxu0 0
    %232 = vmatprep.subr.bf16.mxu0 0
    %233 = vmatpush1.bf16.msra.mxu0 0
    %234 = vmatprep.subr.bf16.mxu0 0
    %235 = vmatpush1.bf16.msra.mxu0 0
    %236 = vmatprep.subr.bf16.mxu0 0
    %237 = vmatpush1.bf16.msra.mxu0 0
    %238 = vmatprep.subr.bf16.mxu0 0
    %239 = vmatpush1.bf16.msra.mxu0 0
    %240 = vmatprep.subr.bf16.mxu0 0
    %241 = vmatpush1.bf16.msra.mxu0 0
    %242 = vmatprep.subr.bf16.mxu0 0
    %243 = vmatpush1.bf16.msra.mxu0 0
    %244 = vmatprep.subr.bf16.mxu0 0
    %245 = vmatpush1.bf16.msra.mxu0 0
    %246 = vmatprep.subr.bf16.mxu0 0
    %247 = vmatpush1.bf16.msra.mxu0 0
    %248 = vmatprep.subr.bf16.mxu0 0
    %249 = vmatpush1.bf16.msra.mxu0 0
    %250 = vmatprep.mubr.bf16.mxu0 0
    %251 = vmatmul.mubr.bf16.gmra.mrb[0].mxu0 %v204
    %v252 = vpop.f32.mrb[0].mxu0
    %v253 = vadd.f32 0.0, %v252
    %v254 = vpop.f32.mrb[0].mxu0
    %v255 = vadd.f32 0.0, %v254
    %v256 = vpop.f32.mrb[0].mxu0
    %v257 = vpop.f32.mrb[0].mxu0
    %258 = vdwg.mxu0
    %259 = vmatprep.subr.bf16.mxu0 %v216
    %260 = vmatpush1.bf16.msra.mxu0 %v213
    %261 = vmatprep.subr.bf16.mxu0 0
    %262 = vmatpush1.bf16.msra.mxu0 0
    %263 = vmatprep.subr.bf16.mxu0 0
    %264 = vmatpush1.bf16.msra.mxu0 0
    %265 = vmatprep.subr.bf16.mxu0 0
    %266 = vmatpush1.bf16.msra.mxu0 0
    %267 = vmatprep.subr.bf16.mxu0 0
    %268 = vmatpush1.bf16.msra.mxu0 0
    %269 = vmatprep.subr.bf16.mxu0 0
    %270 = vmatpush1.bf16.msra.mxu0 0
    %271 = vmatprep.subr.bf16.mxu0 0
    %272 = vmatpush1.bf16.msra.mxu0 0
    %273 = vmatprep.subr.bf16.mxu0 0
    %274 = vmatpush1.bf16.msra.mxu0 0
    %275 = vmatprep.subr.bf16.mxu0 0
    %276 = vmatpush1.bf16.msra.mxu0 0
    %277 = vmatprep.subr.bf16.mxu0 0
    %278 = vmatpush1.bf16.msra.mxu0 0
    %279 = vmatprep.subr.bf16.mxu0 0
    %280 = vmatpush1.bf16.msra.mxu0 0
    %281 = vmatprep.subr.bf16.mxu0 0
    %282 = vmatpush1.bf16.msra.mxu0 0
    %283 = vmatprep.subr.bf16.mxu0 0
    %284 = vmatpush1.bf16.msra.mxu0 0
    %285 = vmatprep.subr.bf16.mxu0 0
    %286 = vmatpush1.bf16.msra.mxu0 0
    %287 = vmatprep.subr.bf16.mxu0 0
    %288 = vmatpush1.bf16.msra.mxu0 0
    %289 = vmatprep.subr.bf16.mxu0 0
    %290 = vmatpush1.bf16.msra.mxu0 0
    %291 = vmatprep.mubr.bf16.mxu0 0
    %292 = vmatmul.mubr.bf16.gmra.mrb[0].mxu0 %v204
    %v293 = vpop.f32.mrb[0].mxu0
    %v294 = vadd.f32 0.0, %v293
    %v295 = vpop.f32.mrb[0].mxu0
    %v296 = vadd.f32 0.0, %v295
    %v297 = vpop.f32.mrb[0].mxu0
    %v298 = vpop.f32.mrb[0].mxu0
    %299 = vdwg.mxu0
    %v301 = vsel %vm92, %v79, 0
    %303 = vmatprep.subr.bf16.mxu0 %v210
    %304 = vmatpush1.bf16.msra.mxu0 %v207
    %305 = vmatprep.subr.bf16.mxu0 0
    %306 = vmatpush1.bf16.msra.mxu0 0
    %307 = vmatprep.subr.bf16.mxu0 0
    %308 = vmatpush1.bf16.msra.mxu0 0
    %309 = vmatprep.subr.bf16.mxu0 0
    %310 = vmatpush1.bf16.msra.mxu0 0
    %311 = vmatprep.subr.bf16.mxu0 0
    %312 = vmatpush1.bf16.msra.mxu0 0
    %313 = vmatprep.subr.bf16.mxu0 0
    %314 = vmatpush1.bf16.msra.mxu0 0
    %315 = vmatprep.subr.bf16.mxu0 0
    %316 = vmatpush1.bf16.msra.mxu0 0
    %317 = vmatprep.subr.bf16.mxu0 0
    %318 = vmatpush1.bf16.msra.mxu0 0
    %319 = vmatprep.subr.bf16.mxu0 0
    %320 = vmatpush1.bf16.msra.mxu0 0
    %321 = vmatprep.subr.bf16.mxu0 0
    %322 = vmatpush1.bf16.msra.mxu0 0
    %323 = vmatprep.subr.bf16.mxu0 0
    %324 = vmatpush1.bf16.msra.mxu0 0
    %325 = vmatprep.subr.bf16.mxu0 0
    %326 = vmatpush1.bf16.msra.mxu0 0
    %327 = vmatprep.subr.bf16.mxu0 0
    %328 = vmatpush1.bf16.msra.mxu0 0
    %329 = vmatprep.subr.bf16.mxu0 0
    %330 = vmatpush1.bf16.msra.mxu0 0
    %331 = vmatprep.subr.bf16.mxu0 0
    %332 = vmatpush1.bf16.msra.mxu0 0
    %333 = vmatprep.subr.bf16.mxu0 0
    %334 = vmatpush1.bf16.msra.mxu0 0
    %335 = vmatprep.mubr.bf16.mxu0 0
    %336 = vmatmul.mubr.bf16.gmra.mrb[0].mxu0 %v301
    %v337 = vpop.f32.mrb[0].mxu0
    %v338 = vadd.f32 0.0, %v337
    %v339 = vpop.f32.mrb[0].mxu0
    %v340 = vadd.f32 0.0, %v339
    %v341 = vpop.f32.mrb[0].mxu0
    %v342 = vpop.f32.mrb[0].mxu0
    %343 = vdwg.mxu0
    %344 = vmatprep.subr.bf16.mxu0 %v216
    %345 = vmatpush1.bf16.msra.mxu0 %v213
    %346 = vmatprep.subr.bf16.mxu0 0
    %347 = vmatpush1.bf16.msra.mxu0 0
    %348 = vmatprep.subr.bf16.mxu0 0
    %349 = vmatpush1.bf16.msra.mxu0 0
    %350 = vmatprep.subr.bf16.mxu0 0
    %351 = vmatpush1.bf16.msra.mxu0 0
    %352 = vmatprep.subr.bf16.mxu0 0
    %353 = vmatpush1.bf16.msra.mxu0 0
    %354 = vmatprep.subr.bf16.mxu0 0
    %355 = vmatpush1.bf16.msra.mxu0 0
    %356 = vmatprep.subr.bf16.mxu0 0
    %357 = vmatpush1.bf16.msra.mxu0 0
    %358 = vmatprep.subr.bf16.mxu0 0
    %359 = vmatpush1.bf16.msra.mxu0 0
    %360 = vmatprep.subr.bf16.mxu0 0
    %361 = vmatpush1.bf16.msra.mxu0 0
    %362 = vmatprep.subr.bf16.mxu0 0
    %363 = vmatpush1.bf16.msra.mxu0 0
    %364 = vmatprep.subr.bf16.mxu0 0
    %365 = vmatpush1.bf16.msra.mxu0 0
    %366 = vmatprep.subr.bf16.mxu0 0
    %367 = vmatpush1.bf16.msra.mxu0 0
    %368 = vmatprep.subr.bf16.mxu0 0
    %369 = vmatpush1.bf16.msra.mxu0 0
    %370 = vmatprep.subr.bf16.mxu0 0
    %371 = vmatpush1.bf16.msra.mxu0 0
    %372 = vmatprep.subr.bf16.mxu0 0
    %373 = vmatpush1.bf16.msra.mxu0 0
    %374 = vmatprep.subr.bf16.mxu0 0
    %375 = vmatpush1.bf16.msra.mxu0 0
    %376 = vmatprep.mubr.bf16.mxu0 0
    %377 = vmatmul.mubr.bf16.gmra.mrb[0].mxu0 %v301
    %v378 = vpop.f32.mrb[0].mxu0
    %v379 = vadd.f32 0.0, %v378
    %v380 = vpop.f32.mrb[0].mxu0
    %v381 = vadd.f32 0.0, %v380
    %v382 = vpop.f32.mrb[0].mxu0
    %v383 = vpop.f32.mrb[0].mxu0
    %384 = vdwg.mxu0
    %v385 = vadd.f32 %v144, %v253
    %v386 = vadd.f32 %v146, %v255
    %v387 = vadd.f32 %v185, %v294
    %v388 = vadd.f32 %v187, %v296
    %v389 = vadd.f32 %v144, %v338
    %v390 = vadd.f32 %v146, %v340
    %v391 = vadd.f32 %v185, %v379
    %v392 = vadd.f32 %v187, %v381
    %v393 = vld [vmem:[%s5] sm:$0xf]
    %v395 = vlaneseq
    %v396 = vshrl.u32 %v395, 7
    %v397 = vsub.s32 0, %v396
    %v398 = vrot.slane %v393, %v397
    %v399 = vlaneseq
    %v400 = vshrl.u32 %v399, 7
    %v401 = vsub.s32 1, %v400
    %v402 = vrot.slane %v393, %v401
    %v403 = vlaneseq
    %v404 = vshrl.u32 %v403, 7
    %v405 = vsub.s32 2, %v404
    %v406 = vrot.slane %v393, %v405
    %v407 = vlaneseq
    %v408 = vshrl.u32 %v407, 7
    %v409 = vsub.s32 3, %v408
    %v410 = vrot.slane %v393, %v409
    %v415 = vadd.f32 %v385, %v398
    %v416 = vadd.f32 %v386, %v402
    %v417 = vadd.f32 %v387, %v406
    %v418 = vadd.f32 %v388, %v410
    %v419 = vadd.f32 %v389, %v398
    %v420 = vadd.f32 %v390, %v402
    %v421 = vadd.f32 %v391, %v406
    %v422 = vadd.f32 %v392, %v410
    %v423 = vmax.f32 %v415, 0.0
    %v424 = vmax.f32 %v416, 0.0
    %v425 = vmax.f32 %v417, 0.0
    %v426 = vmax.f32 %v418, 0.0
    %v427 = vmax.f32 %v419, 0.0
    %v428 = vmax.f32 %v420, 0.0
    %v429 = vmax.f32 %v421, 0.0
    %v430 = vmax.f32 %v422, 0.0
    %v431 = vpack.c.bf16 %v427, %v423
    %v432 = vpack.c.bf16 %v428, %v424
    %v433 = vpack.c.bf16 %v429, %v425
    %v434 = vpack.c.bf16 %v430, %v426
    %v435 = vld [vmem:[#allocation3] sm:$0xff]
    %v436 = vld [vmem:[#allocation3 + $0x8] sm:$0xff]
    %v437 = vld [vmem:[#allocation3 + $0x10] sm:$0xff]
    %v438 = vld [vmem:[#allocation3 + $0x18] sm:$0xff]
    %v439 = vld [vmem:[#allocation3 + $0x20] sm:$0xff]
    %v440 = vld [vmem:[#allocation3 + $0x28] sm:$0xff]
    %v441 = vld [vmem:[#allocation3 + $0x30] sm:$0xff]
    %v442 = vld [vmem:[#allocation3 + $0x38] sm:$0xff]
    %v443 = vld [vmem:[#allocation3 + $0x40] sm:$0xff]
    %v444 = vld [vmem:[#allocation3 + $0x48] sm:$0xff]
    %v445 = vld [vmem:[#allocation3 + $0x50] sm:$0xff]
    %v446 = vld [vmem:[#allocation3 + $0x58] sm:$0xff]
    %v447 = vld [vmem:[#allocation3 + $0x60] sm:$0xff]
    %v448 = vld [vmem:[#allocation3 + $0x68] sm:$0xff]
    %v449 = vld [vmem:[#allocation3 + $0x70] sm:$0xff]
    %v450 = vld [vmem:[#allocation3 + $0x78] sm:$0xff]
    %v451 = vld [vmem:[#allocation3 + $0x80] sm:$0xff]
    %v452 = vld [vmem:[#allocation3 + $0x88] sm:$0xff]
    %v453 = vld [vmem:[#allocation3 + $0x90] sm:$0xff]
    %v454 = vld [vmem:[#allocation3 + $0x98] sm:$0xff]
    %v455 = vld [vmem:[#allocation3 + $0xa0] sm:$0xff]
    %v456 = vld [vmem:[#allocation3 + $0xa8] sm:$0xff]
    %v457 = vld [vmem:[#allocation3 + $0xb0] sm:$0xff]
    %v458 = vld [vmem:[#allocation3 + $0xb8] sm:$0xff]
    %v459 = vld [vmem:[#allocation3 + $0xc0] sm:$0xff]
    %v460 = vld [vmem:[#allocation3 + $0xc8] sm:$0xff]
    %v461 = vld [vmem:[#allocation3 + $0xd0] sm:$0xff]
    %v462 = vld [vmem:[#allocation3 + $0xd8] sm:$0xff]
    %v463 = vld [vmem:[#allocation3 + $0xe0] sm:$0xff]
    %v464 = vld [vmem:[#allocation3 + $0xe8] sm:$0xff]
    %v465 = vld [vmem:[#allocation3 + $0xf0] sm:$0xff]
    %v466 = vld [vmem:[#allocation3 + $0xf8] sm:$0xff]
    %v467 = vld [vmem:[#allocation3 + $0x100] sm:$0xff]
    %v468 = vld [vmem:[#allocation3 + $0x108] sm:$0xff]
    %v469 = vld [vmem:[#allocation3 + $0x110] sm:$0xff]
    %v470 = vld [vmem:[#allocation3 + $0x118] sm:$0xff]
    %v471 = vld [vmem:[#allocation3 + $0x120] sm:$0xff]
    %v472 = vld [vmem:[#allocation3 + $0x128] sm:$0xff]
    %v473 = vld [vmem:[#allocation3 + $0x130] sm:$0xff]
    %v474 = vld [vmem:[#allocation3 + $0x138] sm:$0xff]
    %v475 = vld [vmem:[#allocation3 + $0x140] sm:$0xff]
    %v476 = vld [vmem:[#allocation3 + $0x148] sm:$0xff]
    %v477 = vld [vmem:[#allocation3 + $0x150] sm:$0xff]
    %v478 = vld [vmem:[#allocation3 + $0x158] sm:$0xff]
    %v479 = vld [vmem:[#allocation3 + $0x160] sm:$0xff]
    %v480 = vld [vmem:[#allocation3 + $0x168] sm:$0xff]
    %v481 = vld [vmem:[#allocation3 + $0x170] sm:$0xff]
    %v482 = vld [vmem:[#allocation3 + $0x178] sm:$0xff]
    %v483 = vld [vmem:[#allocation3 + $0x180] sm:$0xff]
    %v484 = vld [vmem:[#allocation3 + $0x188] sm:$0xff]
    %v485 = vld [vmem:[#allocation3 + $0x190] sm:$0xff]
    %v486 = vld [vmem:[#allocation3 + $0x198] sm:$0xff]
    %v487 = vld [vmem:[#allocation3 + $0x1a0] sm:$0xff]
    %v488 = vld [vmem:[#allocation3 + $0x1a8] sm:$0xff]
    %v489 = vld [vmem:[#allocation3 + $0x1b0] sm:$0xff]
    %v490 = vld [vmem:[#allocation3 + $0x1b8] sm:$0xff]
    %v491 = vld [vmem:[#allocation3 + $0x1c0] sm:$0xff]
    %v492 = vld [vmem:[#allocation3 + $0x1c8] sm:$0xff]
    %v493 = vld [vmem:[#allocation3 + $0x1d0] sm:$0xff]
    %v494 = vld [vmem:[#allocation3 + $0x1d8] sm:$0xff]
    %v495 = vld [vmem:[#allocation3 + $0x1e0] sm:$0xff]
    %v496 = vld [vmem:[#allocation3 + $0x1e8] sm:$0xff]
    %v497 = vld [vmem:[#allocation3 + $0x1f0] sm:$0xff]
    %v498 = vld [vmem:[#allocation3 + $0x1f8] sm:$0xff]
    %v499 = vld [vmem:[#allocation3 + $0x200] sm:$0xff]
    %v500 = vld [vmem:[#allocation3 + $0x208] sm:$0xff]
    %v501 = vld [vmem:[#allocation3 + $0x210] sm:$0xff]
    %v502 = vld [vmem:[#allocation3 + $0x218] sm:$0xff]
    %v503 = vld [vmem:[#allocation3 + $0x220] sm:$0xff]
    %v504 = vld [vmem:[#allocation3 + $0x228] sm:$0xff]
    %v505 = vld [vmem:[#allocation3 + $0x230] sm:$0xff]
    %v506 = vld [vmem:[#allocation3 + $0x238] sm:$0xff]
    %v507 = vld [vmem:[#allocation3 + $0x240] sm:$0xff]
    %v508 = vld [vmem:[#allocation3 + $0x248] sm:$0xff]
    %v509 = vld [vmem:[#allocation3 + $0x250] sm:$0xff]
    %v510 = vld [vmem:[#allocation3 + $0x258] sm:$0xff]
    %v511 = vld [vmem:[#allocation3 + $0x260] sm:$0xff]
    %v512 = vld [vmem:[#allocation3 + $0x268] sm:$0xff]
    %v513 = vld [vmem:[#allocation3 + $0x270] sm:$0xff]
    %v514 = vld [vmem:[#allocation3 + $0x278] sm:$0xff]
    %v515 = vld [vmem:[#allocation3 + $0x280] sm:$0xff]
    %v516 = vld [vmem:[#allocation3 + $0x288] sm:$0xff]
    %v517 = vld [vmem:[#allocation3 + $0x290] sm:$0xff]
    %v518 = vld [vmem:[#allocation3 + $0x298] sm:$0xff]
    %v519 = vld [vmem:[#allocation3 + $0x2a0] sm:$0xff]
    %v520 = vld [vmem:[#allocation3 + $0x2a8] sm:$0xff]
    %v521 = vld [vmem:[#allocation3 + $0x2b0] sm:$0xff]
    %v522 = vld [vmem:[#allocation3 + $0x2b8] sm:$0xff]
    %v523 = vld [vmem:[#allocation3 + $0x2c0] sm:$0xff]
    %v524 = vld [vmem:[#allocation3 + $0x2c8] sm:$0xff]
    %v525 = vld [vmem:[#allocation3 + $0x2d0] sm:$0xff]
    %v526 = vld [vmem:[#allocation3 + $0x2d8] sm:$0xff]
    %v527 = vld [vmem:[#allocation3 + $0x2e0] sm:$0xff]
    %v528 = vld [vmem:[#allocation3 + $0x2e8] sm:$0xff]
    %v529 = vld [vmem:[#allocation3 + $0x2f0] sm:$0xff]
    %v530 = vld [vmem:[#allocation3 + $0x2f8] sm:$0xff]
    %v531 = vld [vmem:[#allocation3 + $0x300] sm:$0xff]
    %v532 = vld [vmem:[#allocation3 + $0x308] sm:$0xff]
    %v533 = vld [vmem:[#allocation3 + $0x310] sm:$0xff]
    %v534 = vld [vmem:[#allocation3 + $0x318] sm:$0xff]
    %v535 = vld [vmem:[#allocation3 + $0x320] sm:$0xff]
    %v536 = vld [vmem:[#allocation3 + $0x328] sm:$0xff]
    %v537 = vld [vmem:[#allocation3 + $0x330] sm:$0xff]
    %v538 = vld [vmem:[#allocation3 + $0x338] sm:$0xff]
    %v539 = vld [vmem:[#allocation3 + $0x340] sm:$0xff]
    %v540 = vld [vmem:[#allocation3 + $0x348] sm:$0xff]
    %v541 = vld [vmem:[#allocation3 + $0x350] sm:$0xff]
    %v542 = vld [vmem:[#allocation3 + $0x358] sm:$0xff]
    %v543 = vld [vmem:[#allocation3 + $0x360] sm:$0xff]
    %v544 = vld [vmem:[#allocation3 + $0x368] sm:$0xff]
    %v545 = vld [vmem:[#allocation3 + $0x370] sm:$0xff]
    %v546 = vld [vmem:[#allocation3 + $0x378] sm:$0xff]
    %v547 = vld [vmem:[#allocation3 + $0x380] sm:$0xff]
    %v548 = vld [vmem:[#allocation3 + $0x388] sm:$0xff]
    %v549 = vld [vmem:[#allocation3 + $0x390] sm:$0xff]
    %v550 = vld [vmem:[#allocation3 + $0x398] sm:$0xff]
    %v551 = vld [vmem:[#allocation3 + $0x3a0] sm:$0xff]
    %v552 = vld [vmem:[#allocation3 + $0x3a8] sm:$0xff]
    %v553 = vld [vmem:[#allocation3 + $0x3b0] sm:$0xff]
    %v554 = vld [vmem:[#allocation3 + $0x3b8] sm:$0xff]
    %v555 = vld [vmem:[#allocation3 + $0x3c0] sm:$0xff]
    %v556 = vld [vmem:[#allocation3 + $0x3c8] sm:$0xff]
    %v557 = vld [vmem:[#allocation3 + $0x3d0] sm:$0xff]
    %v558 = vld [vmem:[#allocation3 + $0x3d8] sm:$0xff]
    %v559 = vld [vmem:[#allocation3 + $0x3e0] sm:$0xff]
    %v560 = vld [vmem:[#allocation3 + $0x3e8] sm:$0xff]
    %v561 = vld [vmem:[#allocation3 + $0x3f0] sm:$0xff]
    %v562 = vld [vmem:[#allocation3 + $0x3f8] sm:$0xff]
    %v563 = vld [vmem:[%s7] sm:$0xf]
    %v565 = vlaneseq
    %v566 = vshrl.u32 %v565, 7
    %v567 = vsub.s32 0, %v566
    %v568 = vrot.slane %v563, %v567
    %v569 = vlaneseq
    %v570 = vshrl.u32 %v569, 7
    %v571 = vsub.s32 1, %v570
    %v572 = vrot.slane %v563, %v571
    %v573 = vlaneseq
    %v574 = vshrl.u32 %v573, 7
    %v575 = vsub.s32 2, %v574
    %v576 = vrot.slane %v563, %v575
    %v577 = vlaneseq
    %v578 = vshrl.u32 %v577, 7
    %v579 = vsub.s32 3, %v578
    %v580 = vrot.slane %v563, %v579
    %v713 = vunpack.c.l.b16 %v435
    %v714 = vunpack.c.h.b16 %v435
    %v715 = vunpack.c.l.b16 %v436
    %v716 = vunpack.c.h.b16 %v436
    %v717 = vunpack.c.l.b16 %v437
    %v718 = vunpack.c.h.b16 %v437
    %v719 = vunpack.c.l.b16 %v438
    %v720 = vunpack.c.h.b16 %v438
    %v721 = vunpack.c.l.b16 %v439
    %v722 = vunpack.c.h.b16 %v439
    %v723 = vunpack.c.l.b16 %v440
    %v724 = vunpack.c.h.b16 %v440
    %v725 = vunpack.c.l.b16 %v441
    %v726 = vunpack.c.h.b16 %v441
    %v727 = vunpack.c.l.b16 %v442
    %v728 = vunpack.c.h.b16 %v442
    %v729 = vunpack.c.l.b16 %v443
    %v730 = vunpack.c.h.b16 %v443
    %v731 = vunpack.c.l.b16 %v444
    %v732 = vunpack.c.h.b16 %v444
    %v733 = vunpack.c.l.b16 %v445
    %v734 = vunpack.c.h.b16 %v445
    %v735 = vunpack.c.l.b16 %v446
    %v736 = vunpack.c.h.b16 %v446
    %v737 = vunpack.c.l.b16 %v447
    %v738 = vunpack.c.h.b16 %v447
    %v739 = vunpack.c.l.b16 %v448
    %v740 = vunpack.c.h.b16 %v448
    %v741 = vunpack.c.l.b16 %v449
    %v742 = vunpack.c.h.b16 %v449
    %v743 = vunpack.c.l.b16 %v450
    %v744 = vunpack.c.h.b16 %v450
    %v745 = vunpack.c.l.b16 %v451
    %v746 = vunpack.c.h.b16 %v451
    %v747 = vunpack.c.l.b16 %v452
    %v748 = vunpack.c.h.b16 %v452
    %v749 = vunpack.c.l.b16 %v453
    %v750 = vunpack.c.h.b16 %v453
    %v751 = vunpack.c.l.b16 %v454
    %v752 = vunpack.c.h.b16 %v454
    %v753 = vunpack.c.l.b16 %v455
    %v754 = vunpack.c.h.b16 %v455
    %v755 = vunpack.c.l.b16 %v456
    %v756 = vunpack.c.h.b16 %v456
    %v757 = vunpack.c.l.b16 %v457
    %v758 = vunpack.c.h.b16 %v457
    %v759 = vunpack.c.l.b16 %v458
    %v760 = vunpack.c.h.b16 %v458
    %v761 = vunpack.c.l.b16 %v459
    %v762 = vunpack.c.h.b16 %v459
    %v763 = vunpack.c.l.b16 %v460
    %v764 = vunpack.c.h.b16 %v460
    %v765 = vunpack.c.l.b16 %v461
    %v766 = vunpack.c.h.b16 %v461
    %v767 = vunpack.c.l.b16 %v462
    %v768 = vunpack.c.h.b16 %v462
    %v769 = vunpack.c.l.b16 %v463
    %v770 = vunpack.c.h.b16 %v463
    %v771 = vunpack.c.l.b16 %v464
    %v772 = vunpack.c.h.b16 %v464
    %v773 = vunpack.c.l.b16 %v465
    %v774 = vunpack.c.h.b16 %v465
    %v775 = vunpack.c.l.b16 %v466
    %v776 = vunpack.c.h.b16 %v466
    %v777 = vunpack.c.l.b16 %v467
    %v778 = vunpack.c.h.b16 %v467
    %v779 = vunpack.c.l.b16 %v468
    %v780 = vunpack.c.h.b16 %v468
    %v781 = vunpack.c.l.b16 %v469
    %v782 = vunpack.c.h.b16 %v469
    %v783 = vunpack.c.l.b16 %v470
    %v784 = vunpack.c.h.b16 %v470
    %v785 = vunpack.c.l.b16 %v471
    %v786 = vunpack.c.h.b16 %v471
    %v787 = vunpack.c.l.b16 %v472
    %v788 = vunpack.c.h.b16 %v472
    %v789 = vunpack.c.l.b16 %v473
    %v790 = vunpack.c.h.b16 %v473
    %v791 = vunpack.c.l.b16 %v474
    %v792 = vunpack.c.h.b16 %v474
    %v793 = vunpack.c.l.b16 %v475
    %v794 = vunpack.c.h.b16 %v475
    %v795 = vunpack.c.l.b16 %v476
    %v796 = vunpack.c.h.b16 %v476
    %v797 = vunpack.c.l.b16 %v477
    %v798 = vunpack.c.h.b16 %v477
    %v799 = vunpack.c.l.b16 %v478
    %v800 = vunpack.c.h.b16 %v478
    %v801 = vunpack.c.l.b16 %v479
    %v802 = vunpack.c.h.b16 %v479
    %v803 = vunpack.c.l.b16 %v480
    %v804 = vunpack.c.h.b16 %v480
    %v805 = vunpack.c.l.b16 %v481
    %v806 = vunpack.c.h.b16 %v481
    %v807 = vunpack.c.l.b16 %v482
    %v808 = vunpack.c.h.b16 %v482
    %v809 = vunpack.c.l.b16 %v483
    %v810 = vunpack.c.h.b16 %v483
    %v811 = vunpack.c.l.b16 %v484
    %v812 = vunpack.c.h.b16 %v484
    %v813 = vunpack.c.l.b16 %v485
    %v814 = vunpack.c.h.b16 %v485
    %v815 = vunpack.c.l.b16 %v486
    %v816 = vunpack.c.h.b16 %v486
    %v817 = vunpack.c.l.b16 %v487
    %v818 = vunpack.c.h.b16 %v487
    %v819 = vunpack.c.l.b16 %v488
    %v820 = vunpack.c.h.b16 %v488
    %v821 = vunpack.c.l.b16 %v489
    %v822 = vunpack.c.h.b16 %v489
    %v823 = vunpack.c.l.b16 %v490
    %v824 = vunpack.c.h.b16 %v490
    %v825 = vunpack.c.l.b16 %v491
    %v826 = vunpack.c.h.b16 %v491
    %v827 = vunpack.c.l.b16 %v492
    %v828 = vunpack.c.h.b16 %v492
    %v829 = vunpack.c.l.b16 %v493
    %v830 = vunpack.c.h.b16 %v493
    %v831 = vunpack.c.l.b16 %v494
    %v832 = vunpack.c.h.b16 %v494
    %v833 = vunpack.c.l.b16 %v495
    %v834 = vunpack.c.h.b16 %v495
    %v835 = vunpack.c.l.b16 %v496
    %v836 = vunpack.c.h.b16 %v496
    %v837 = vunpack.c.l.b16 %v497
    %v838 = vunpack.c.h.b16 %v497
    %v839 = vunpack.c.l.b16 %v498
    %v840 = vunpack.c.h.b16 %v498
    %v841 = vunpack.c.l.b16 %v499
    %v842 = vunpack.c.h.b16 %v499
    %v843 = vunpack.c.l.b16 %v500
    %v844 = vunpack.c.h.b16 %v500
    %v845 = vunpack.c.l.b16 %v501
    %v846 = vunpack.c.h.b16 %v501
    %v847 = vunpack.c.l.b16 %v502
    %v848 = vunpack.c.h.b16 %v502
    %v849 = vunpack.c.l.b16 %v503
    %v850 = vunpack.c.h.b16 %v503
    %v851 = vunpack.c.l.b16 %v504
    %v852 = vunpack.c.h.b16 %v504
    %v853 = vunpack.c.l.b16 %v505
    %v854 = vunpack.c.h.b16 %v505
    %v855 = vunpack.c.l.b16 %v506
    %v856 = vunpack.c.h.b16 %v506
    %v857 = vunpack.c.l.b16 %v507
    %v858 = vunpack.c.h.b16 %v507
    %v859 = vunpack.c.l.b16 %v508
    %v860 = vunpack.c.h.b16 %v508
    %v861 = vunpack.c.l.b16 %v509
    %v862 = vunpack.c.h.b16 %v509
    %v863 = vunpack.c.l.b16 %v510
    %v864 = vunpack.c.h.b16 %v510
    %v865 = vunpack.c.l.b16 %v511
    %v866 = vunpack.c.h.b16 %v511
    %v867 = vunpack.c.l.b16 %v512
    %v868 = vunpack.c.h.b16 %v512
    %v869 = vunpack.c.l.b16 %v513
    %v870 = vunpack.c.h.b16 %v513
    %v871 = vunpack.c.l.b16 %v514
    %v872 = vunpack.c.h.b16 %v514
    %v873 = vunpack.c.l.b16 %v515
    %v874 = vunpack.c.h.b16 %v515
    %v875 = vunpack.c.l.b16 %v516
    %v876 = vunpack.c.h.b16 %v516
    %v877 = vunpack.c.l.b16 %v517
    %v878 = vunpack.c.h.b16 %v517
    %v879 = vunpack.c.l.b16 %v518
    %v880 = vunpack.c.h.b16 %v518
    %v881 = vunpack.c.l.b16 %v519
    %v882 = vunpack.c.h.b16 %v519
    %v883 = vunpack.c.l.b16 %v520
    %v884 = vunpack.c.h.b16 %v520
    %v885 = vunpack.c.l.b16 %v521
    %v886 = vunpack.c.h.b16 %v521
    %v887 = vunpack.c.l.b16 %v522
    %v888 = vunpack.c.h.b16 %v522
    %v889 = vunpack.c.l.b16 %v523
    %v890 = vunpack.c.h.b16 %v523
    %v891 = vunpack.c.l.b16 %v524
    %v892 = vunpack.c.h.b16 %v524
    %v893 = vunpack.c.l.b16 %v525
    %v894 = vunpack.c.h.b16 %v525
    %v895 = vunpack.c.l.b16 %v526
    %v896 = vunpack.c.h.b16 %v526
    %v897 = vunpack.c.l.b16 %v527
    %v898 = vunpack.c.h.b16 %v527
    %v899 = vunpack.c.l.b16 %v528
    %v900 = vunpack.c.h.b16 %v528
    %v901 = vunpack.c.l.b16 %v529
    %v902 = vunpack.c.h.b16 %v529
    %v903 = vunpack.c.l.b16 %v530
    %v904 = vunpack.c.h.b16 %v530
    %v905 = vunpack.c.l.b16 %v531
    %v906 = vunpack.c.h.b16 %v531
    %v907 = vunpack.c.l.b16 %v532
    %v908 = vunpack.c.h.b16 %v532
    %v909 = vunpack.c.l.b16 %v533
    %v910 = vunpack.c.h.b16 %v533
    %v911 = vunpack.c.l.b16 %v534
    %v912 = vunpack.c.h.b16 %v534
    %v913 = vunpack.c.l.b16 %v535
    %v914 = vunpack.c.h.b16 %v535
    %v915 = vunpack.c.l.b16 %v536
    %v916 = vunpack.c.h.b16 %v536
    %v917 = vunpack.c.l.b16 %v537
    %v918 = vunpack.c.h.b16 %v537
    %v919 = vunpack.c.l.b16 %v538
    %v920 = vunpack.c.h.b16 %v538
    %v921 = vunpack.c.l.b16 %v539
    %v922 = vunpack.c.h.b16 %v539
    %v923 = vunpack.c.l.b16 %v540
    %v924 = vunpack.c.h.b16 %v540
    %v925 = vunpack.c.l.b16 %v541
    %v926 = vunpack.c.h.b16 %v541
    %v927 = vunpack.c.l.b16 %v542
    %v928 = vunpack.c.h.b16 %v542
    %v929 = vunpack.c.l.b16 %v543
    %v930 = vunpack.c.h.b16 %v543
    %v931 = vunpack.c.l.b16 %v544
    %v932 = vunpack.c.h.b16 %v544
    %v933 = vunpack.c.l.b16 %v545
    %v934 = vunpack.c.h.b16 %v545
    %v935 = vunpack.c.l.b16 %v546
    %v936 = vunpack.c.h.b16 %v546
    %v937 = vunpack.c.l.b16 %v547
    %v938 = vunpack.c.h.b16 %v547
    %v939 = vunpack.c.l.b16 %v548
    %v940 = vunpack.c.h.b16 %v548
    %v941 = vunpack.c.l.b16 %v549
    %v942 = vunpack.c.h.b16 %v549
    %v943 = vunpack.c.l.b16 %v550
    %v944 = vunpack.c.h.b16 %v550
    %v945 = vunpack.c.l.b16 %v551
    %v946 = vunpack.c.h.b16 %v551
    %v947 = vunpack.c.l.b16 %v552
    %v948 = vunpack.c.h.b16 %v552
    %v949 = vunpack.c.l.b16 %v553
    %v950 = vunpack.c.h.b16 %v553
    %v951 = vunpack.c.l.b16 %v554
    %v952 = vunpack.c.h.b16 %v554
    %v953 = vunpack.c.l.b16 %v555
    %v954 = vunpack.c.h.b16 %v555
    %v955 = vunpack.c.l.b16 %v556
    %v956 = vunpack.c.h.b16 %v556
    %v957 = vunpack.c.l.b16 %v557
    %v958 = vunpack.c.h.b16 %v557
    %v959 = vunpack.c.l.b16 %v558
    %v960 = vunpack.c.h.b16 %v558
    %v961 = vunpack.c.l.b16 %v559
    %v962 = vunpack.c.h.b16 %v559
    %v963 = vunpack.c.l.b16 %v560
    %v964 = vunpack.c.h.b16 %v560
    %v965 = vunpack.c.l.b16 %v561
    %v966 = vunpack.c.h.b16 %v561
    %v967 = vunpack.c.l.b16 %v562
    %v968 = vunpack.c.h.b16 %v562
    %v969 = vpack.c.b16 %v717, %v713
    %v970 = vpack.c.b16 %v718, %v714
    %v971 = vpack.c.b16 %v719, %v715
    %v972 = vpack.c.b16 %v720, %v716
    %v973 = vpack.c.b16 %v725, %v721
    %v974 = vpack.c.b16 %v726, %v722
    %v975 = vpack.c.b16 %v727, %v723
    %v976 = vpack.c.b16 %v728, %v724
    %v977 = vpack.c.b16 %v733, %v729
    %v978 = vpack.c.b16 %v734, %v730
    %v979 = vpack.c.b16 %v735, %v731
    %v980 = vpack.c.b16 %v736, %v732
    %v981 = vpack.c.b16 %v741, %v737
    %v982 = vpack.c.b16 %v742, %v738
    %v983 = vpack.c.b16 %v743, %v739
    %v984 = vpack.c.b16 %v744, %v740
    %v985 = vpack.c.b16 %v749, %v745
    %v986 = vpack.c.b16 %v750, %v746
    %v987 = vpack.c.b16 %v751, %v747
    %v988 = vpack.c.b16 %v752, %v748
    %v989 = vpack.c.b16 %v757, %v753
    %v990 = vpack.c.b16 %v758, %v754
    %v991 = vpack.c.b16 %v759, %v755
    %v992 = vpack.c.b16 %v760, %v756
    %v993 = vpack.c.b16 %v765, %v761
    %v994 = vpack.c.b16 %v766, %v762
    %v995 = vpack.c.b16 %v767, %v763
    %v996 = vpack.c.b16 %v768, %v764
    %v997 = vpack.c.b16 %v773, %v769
    %v998 = vpack.c.b16 %v774, %v770
    %v999 = vpack.c.b16 %v775, %v771
    %v1000 = vpack.c.b16 %v776, %v772
    %v1001 = vpack.c.b16 %v781, %v777
    %v1002 = vpack.c.b16 %v782, %v778
    %v1003 = vpack.c.b16 %v783, %v779
    %v1004 = vpack.c.b16 %v784, %v780
    %v1005 = vpack.c.b16 %v789, %v785
    %v1006 = vpack.c.b16 %v790, %v786
    %v1007 = vpack.c.b16 %v791, %v787
    %v1008 = vpack.c.b16 %v792, %v788
    %v1009 = vpack.c.b16 %v797, %v793
    %v1010 = vpack.c.b16 %v798, %v794
    %v1011 = vpack.c.b16 %v799, %v795
    %v1012 = vpack.c.b16 %v800, %v796
    %v1013 = vpack.c.b16 %v805, %v801
    %v1014 = vpack.c.b16 %v806, %v802
    %v1015 = vpack.c.b16 %v807, %v803
    %v1016 = vpack.c.b16 %v808, %v804
    %v1017 = vpack.c.b16 %v813, %v809
    %v1018 = vpack.c.b16 %v814, %v810
    %v1019 = vpack.c.b16 %v815, %v811
    %v1020 = vpack.c.b16 %v816, %v812
    %v1021 = vpack.c.b16 %v821, %v817
    %v1022 = vpack.c.b16 %v822, %v818
    %v1023 = vpack.c.b16 %v823, %v819
    %v1024 = vpack.c.b16 %v824, %v820
    %v1025 = vpack.c.b16 %v829, %v825
    %v1026 = vpack.c.b16 %v830, %v826
    %v1027 = vpack.c.b16 %v831, %v827
    %v1028 = vpack.c.b16 %v832, %v828
    %v1029 = vpack.c.b16 %v837, %v833
    %v1030 = vpack.c.b16 %v838, %v834
    %v1031 = vpack.c.b16 %v839, %v835
    %v1032 = vpack.c.b16 %v840, %v836
    %v1033 = vpack.c.b16 %v845, %v841
    %v1034 = vpack.c.b16 %v846, %v842
    %v1035 = vpack.c.b16 %v847, %v843
    %v1036 = vpack.c.b16 %v848, %v844
    %v1037 = vpack.c.b16 %v853, %v849
    %v1038 = vpack.c.b16 %v854, %v850
    %v1039 = vpack.c.b16 %v855, %v851
    %v1040 = vpack.c.b16 %v856, %v852
    %v1041 = vpack.c.b16 %v861, %v857
    %v1042 = vpack.c.b16 %v862, %v858
    %v1043 = vpack.c.b16 %v863, %v859
    %v1044 = vpack.c.b16 %v864, %v860
    %v1045 = vpack.c.b16 %v869, %v865
    %v1046 = vpack.c.b16 %v870, %v866
    %v1047 = vpack.c.b16 %v871, %v867
    %v1048 = vpack.c.b16 %v872, %v868
    %v1049 = vpack.c.b16 %v877, %v873
    %v1050 = vpack.c.b16 %v878, %v874
    %v1051 = vpack.c.b16 %v879, %v875
    %v1052 = vpack.c.b16 %v880, %v876
    %v1053 = vpack.c.b16 %v885, %v881
    %v1054 = vpack.c.b16 %v886, %v882
    %v1055 = vpack.c.b16 %v887, %v883
    %v1056 = vpack.c.b16 %v888, %v884
    %v1057 = vpack.c.b16 %v893, %v889
    %v1058 = vpack.c.b16 %v894, %v890
    %v1059 = vpack.c.b16 %v895, %v891
    %v1060 = vpack.c.b16 %v896, %v892
    %v1061 = vpack.c.b16 %v901, %v897
    %v1062 = vpack.c.b16 %v902, %v898
    %v1063 = vpack.c.b16 %v903, %v899
    %v1064 = vpack.c.b16 %v904, %v900
    %v1065 = vpack.c.b16 %v909, %v905
    %v1066 = vpack.c.b16 %v910, %v906
    %v1067 = vpack.c.b16 %v911, %v907
    %v1068 = vpack.c.b16 %v912, %v908
    %v1069 = vpack.c.b16 %v917, %v913
    %v1070 = vpack.c.b16 %v918, %v914
    %v1071 = vpack.c.b16 %v919, %v915
    %v1072 = vpack.c.b16 %v920, %v916
    %v1073 = vpack.c.b16 %v925, %v921
    %v1074 = vpack.c.b16 %v926, %v922
    %v1075 = vpack.c.b16 %v927, %v923
    %v1076 = vpack.c.b16 %v928, %v924
    %v1077 = vpack.c.b16 %v933, %v929
    %v1078 = vpack.c.b16 %v934, %v930
    %v1079 = vpack.c.b16 %v935, %v931
    %v1080 = vpack.c.b16 %v936, %v932
    %v1081 = vpack.c.b16 %v941, %v937
    %v1082 = vpack.c.b16 %v942, %v938
    %v1083 = vpack.c.b16 %v943, %v939
    %v1084 = vpack.c.b16 %v944, %v940
    %v1085 = vpack.c.b16 %v949, %v945
    %v1086 = vpack.c.b16 %v950, %v946
    %v1087 = vpack.c.b16 %v951, %v947
    %v1088 = vpack.c.b16 %v952, %v948
    %v1089 = vpack.c.b16 %v957, %v953
    %v1090 = vpack.c.b16 %v958, %v954
    %v1091 = vpack.c.b16 %v959, %v955
    %v1092 = vpack.c.b16 %v960, %v956
    %v1093 = vpack.c.b16 %v965, %v961
    %v1094 = vpack.c.b16 %v966, %v962
    %v1095 = vpack.c.b16 %v967, %v963
    %v1096 = vpack.c.b16 %v968, %v964
    %1225 = vmatprep.subr.bf16.mxu0 %v970
    %1226 = vmatpush1.bf16.msra.mxu0 %v969
    %1227 = vmatprep.subr.bf16.mxu0 %v974
    %1228 = vmatpush1.bf16.msra.mxu0 %v973
    %1229 = vmatprep.subr.bf16.mxu0 %v978
    %1230 = vmatpush1.bf16.msra.mxu0 %v977
    %1231 = vmatprep.subr.bf16.mxu0 %v982
    %1232 = vmatpush1.bf16.msra.mxu0 %v981
    %1233 = vmatprep.subr.bf16.mxu0 %v986
    %1234 = vmatpush1.bf16.msra.mxu0 %v985
    %1235 = vmatprep.subr.bf16.mxu0 %v990
    %1236 = vmatpush1.bf16.msra.mxu0 %v989
    %1237 = vmatprep.subr.bf16.mxu0 %v994
    %1238 = vmatpush1.bf16.msra.mxu0 %v993
    %1239 = vmatprep.subr.bf16.mxu0 %v998
    %1240 = vmatpush1.bf16.msra.mxu0 %v997
    %1241 = vmatprep.subr.bf16.mxu0 %v1002
    %1242 = vmatpush1.bf16.msra.mxu0 %v1001
    %1243 = vmatprep.subr.bf16.mxu0 %v1006
    %1244 = vmatpush1.bf16.msra.mxu0 %v1005
    %1245 = vmatprep.subr.bf16.mxu0 %v1010
    %1246 = vmatpush1.bf16.msra.mxu0 %v1009
    %1247 = vmatprep.subr.bf16.mxu0 %v1014
    %1248 = vmatpush1.bf16.msra.mxu0 %v1013
    %1249 = vmatprep.subr.bf16.mxu0 %v1018
    %1250 = vmatpush1.bf16.msra.mxu0 %v1017
    %1251 = vmatprep.subr.bf16.mxu0 %v1022
    %1252 = vmatpush1.bf16.msra.mxu0 %v1021
    %1253 = vmatprep.subr.bf16.mxu0 %v1026
    %1254 = vmatpush1.bf16.msra.mxu0 %v1025
    %1255 = vmatprep.subr.bf16.mxu0 %v1030
    %1256 = vmatpush1.bf16.msra.mxu0 %v1029
    %1257 = vmatprep.mubr.bf16.mxu0 %v432
    %1258 = vmatmul.mubr.bf16.gmra.mrb[0].mxu0 %v431
    %v1259 = vpop.f32.mrb[0].mxu0
    %v1260 = vadd.f32 %v568, %v1259
    %v1261 = vpop.f32.mrb[0].mxu0
    %v1262 = vadd.f32 %v572, %v1261
    %v1263 = vpop.f32.mrb[0].mxu0
    %v1264 = vadd.f32 %v568, %v1263
    %v1265 = vpop.f32.mrb[0].mxu0
    %v1266 = vadd.f32 %v572, %v1265
    %1267 = vdwg.mxu0
    %1268 = vmatprep.subr.bf16.mxu0 %v1034
    %1269 = vmatpush1.bf16.msra.mxu0 %v1033
    %1270 = vmatprep.subr.bf16.mxu0 %v1038
    %1271 = vmatpush1.bf16.msra.mxu0 %v1037
    %1272 = vmatprep.subr.bf16.mxu0 %v1042
    %1273 = vmatpush1.bf16.msra.mxu0 %v1041
    %1274 = vmatprep.subr.bf16.mxu0 %v1046
    %1275 = vmatpush1.bf16.msra.mxu0 %v1045
    %1276 = vmatprep.subr.bf16.mxu0 %v1050
    %1277 = vmatpush1.bf16.msra.mxu0 %v1049
    %1278 = vmatprep.subr.bf16.mxu0 %v1054
    %1279 = vmatpush1.bf16.msra.mxu0 %v1053
    %1280 = vmatprep.subr.bf16.mxu0 %v1058
    %1281 = vmatpush1.bf16.msra.mxu0 %v1057
    %1282 = vmatprep.subr.bf16.mxu0 %v1062
    %1283 = vmatpush1.bf16.msra.mxu0 %v1061
    %1284 = vmatprep.subr.bf16.mxu0 %v1066
    %1285 = vmatpush1.bf16.msra.mxu0 %v1065
    %1286 = vmatprep.subr.bf16.mxu0 %v1070
    %1287 = vmatpush1.bf16.msra.mxu0 %v1069
    %1288 = vmatprep.subr.bf16.mxu0 %v1074
    %1289 = vmatpush1.bf16.msra.mxu0 %v1073
    %1290 = vmatprep.subr.bf16.mxu0 %v1078
    %1291 = vmatpush1.bf16.msra.mxu0 %v1077
    %1292 = vmatprep.subr.bf16.mxu0 %v1082
    %1293 = vmatpush1.bf16.msra.mxu0 %v1081
    %1294 = vmatprep.subr.bf16.mxu0 %v1086
    %1295 = vmatpush1.bf16.msra.mxu0 %v1085
    %1296 = vmatprep.subr.bf16.mxu0 %v1090
    %1297 = vmatpush1.bf16.msra.mxu0 %v1089
    %1298 = vmatprep.subr.bf16.mxu0 %v1094
    %1299 = vmatpush1.bf16.msra.mxu0 %v1093
    %1300 = vmatprep.mubr.bf16.mxu0 %v434
    %1301 = vmatmul.mubr.bf16.gmra.mrb[0].mxu0 %v433
    %v1302 = vpop.f32.mrb[0].mxu0
    %v1303 = vadd.f32 %v1260, %v1302
    %v1304 = vpop.f32.mrb[0].mxu0
    %v1305 = vadd.f32 %v1262, %v1304
    %v1306 = vpop.f32.mrb[0].mxu0
    %v1307 = vadd.f32 %v1264, %v1306
    %v1308 = vpop.f32.mrb[0].mxu0
    %v1309 = vadd.f32 %v1266, %v1308
    %1310 = vdwg.mxu0
    %1311 = vmatprep.subr.bf16.mxu0 %v972
    %1312 = vmatpush1.bf16.msra.mxu0 %v971
    %1313 = vmatprep.subr.bf16.mxu0 %v976
    %1314 = vmatpush1.bf16.msra.mxu0 %v975
    %1315 = vmatprep.subr.bf16.mxu0 %v980
    %1316 = vmatpush1.bf16.msra.mxu0 %v979
    %1317 = vmatprep.subr.bf16.mxu0 %v984
    %1318 = vmatpush1.bf16.msra.mxu0 %v983
    %1319 = vmatprep.subr.bf16.mxu0 %v988
    %1320 = vmatpush1.bf16.msra.mxu0 %v987
    %1321 = vmatprep.subr.bf16.mxu0 %v992
    %1322 = vmatpush1.bf16.msra.mxu0 %v991
    %1323 = vmatprep.subr.bf16.mxu0 %v996
    %1324 = vmatpush1.bf16.msra.mxu0 %v995
    %1325 = vmatprep.subr.bf16.mxu0 %v1000
    %1326 = vmatpush1.bf16.msra.mxu0 %v999
    %1327 = vmatprep.subr.bf16.mxu0 %v1004
    %1328 = vmatpush1.bf16.msra.mxu0 %v1003
    %1329 = vmatprep.subr.bf16.mxu0 %v1008
    %1330 = vmatpush1.bf16.msra.mxu0 %v1007
    %1331 = vmatprep.subr.bf16.mxu0 %v1012
    %1332 = vmatpush1.bf16.msra.mxu0 %v1011
    %1333 = vmatprep.subr.bf16.mxu0 %v1016
    %1334 = vmatpush1.bf16.msra.mxu0 %v1015
    %1335 = vmatprep.subr.bf16.mxu0 %v1020
    %1336 = vmatpush1.bf16.msra.mxu0 %v1019
    %1337 = vmatprep.subr.bf16.mxu0 %v1024
    %1338 = vmatpush1.bf16.msra.mxu0 %v1023
    %1339 = vmatprep.subr.bf16.mxu0 %v1028
    %1340 = vmatpush1.bf16.msra.mxu0 %v1027
    %1341 = vmatprep.subr.bf16.mxu0 %v1032
    %1342 = vmatpush1.bf16.msra.mxu0 %v1031
    %1343 = vmatprep.mubr.bf16.mxu0 %v432
    %1344 = vmatmul.mubr.bf16.gmra.mrb[0].mxu0 %v431
    %v1345 = vpop.f32.mrb[0].mxu0
    %v1346 = vadd.f32 %v576, %v1345
    %v1347 = vpop.f32.mrb[0].mxu0
    %v1348 = vadd.f32 %v580, %v1347
    %v1349 = vpop.f32.mrb[0].mxu0
    %v1350 = vadd.f32 %v576, %v1349
    %v1351 = vpop.f32.mrb[0].mxu0
    %v1352 = vadd.f32 %v580, %v1351
    %1353 = vdwg.mxu0
    %1354 = vmatprep.subr.bf16.mxu0 %v1036
    %1355 = vmatpush1.bf16.msra.mxu0 %v1035
    %1356 = vmatprep.subr.bf16.mxu0 %v1040
    %1357 = vmatpush1.bf16.msra.mxu0 %v1039
    %1358 = vmatprep.subr.bf16.mxu0 %v1044
    %1359 = vmatpush1.bf16.msra.mxu0 %v1043
    %1360 = vmatprep.subr.bf16.mxu0 %v1048
    %1361 = vmatpush1.bf16.msra.mxu0 %v1047
    %1362 = vmatprep.subr.bf16.mxu0 %v1052
    %1363 = vmatpush1.bf16.msra.mxu0 %v1051
    %1364 = vmatprep.subr.bf16.mxu0 %v1056
    %1365 = vmatpush1.bf16.msra.mxu0 %v1055
    %1366 = vmatprep.subr.bf16.mxu0 %v1060
    %1367 = vmatpush1.bf16.msra.mxu0 %v1059
    %1368 = vmatprep.subr.bf16.mxu0 %v1064
    %1369 = vmatpush1.bf16.msra.mxu0 %v1063
    %1370 = vmatprep.subr.bf16.mxu0 %v1068
    %1371 = vmatpush1.bf16.msra.mxu0 %v1067
    %1372 = vmatprep.subr.bf16.mxu0 %v1072
    %1373 = vmatpush1.bf16.msra.mxu0 %v1071
    %1374 = vmatprep.subr.bf16.mxu0 %v1076
    %1375 = vmatpush1.bf16.msra.mxu0 %v1075
    %1376 = vmatprep.subr.bf16.mxu0 %v1080
    %1377 = vmatpush1.bf16.msra.mxu0 %v1079
    %1378 = vmatprep.subr.bf16.mxu0 %v1084
    %1379 = vmatpush1.bf16.msra.mxu0 %v1083
    %1380 = vmatprep.subr.bf16.mxu0 %v1088
    %1381 = vmatpush1.bf16.msra.mxu0 %v1087
    %1382 = vmatprep.subr.bf16.mxu0 %v1092
    %1383 = vmatpush1.bf16.msra.mxu0 %v1091
    %1384 = vmatprep.subr.bf16.mxu0 %v1096
    %1385 = vmatpush1.bf16.msra.mxu0 %v1095
    %1386 = vmatprep.mubr.bf16.mxu0 %v434
    %1387 = vmatmul.mubr.bf16.gmra.mrb[0].mxu0 %v433
    %v1388 = vpop.f32.mrb[0].mxu0
    %v1389 = vadd.f32 %v1346, %v1388
    %v1390 = vpop.f32.mrb[0].mxu0
    %v1391 = vadd.f32 %v1348, %v1390
    %v1392 = vpop.f32.mrb[0].mxu0
    %v1393 = vadd.f32 %v1350, %v1392
    %v1394 = vpop.f32.mrb[0].mxu0
    %v1395 = vadd.f32 %v1352, %v1394
    %1396 = vdwg.mxu0
    %v1397 = vmax.f32 %v1303, 0.0
    %v1398 = vmax.f32 %v1305, 0.0
    %v1399 = vmax.f32 %v1389, 0.0
    %v1400 = vmax.f32 %v1391, 0.0
    %v1401 = vmax.f32 %v1307, 0.0
    %v1402 = vmax.f32 %v1309, 0.0
    %v1403 = vmax.f32 %v1393, 0.0
    %v1404 = vmax.f32 %v1395, 0.0
    %v1405 = vpack.c.bf16 %v1401, %v1397
    %v1406 = vpack.c.bf16 %v1402, %v1398
    %v1407 = vpack.c.bf16 %v1403, %v1399
    %v1408 = vpack.c.bf16 %v1404, %v1400
    %v1409 = vld [vmem:[#allocation6] sm:$0xff]
    %v1410 = vld [vmem:[#allocation6 + $0x8] sm:$0xff]
    %v1411 = vld [vmem:[#allocation6 + $0x10] sm:$0xff]
    %v1412 = vld [vmem:[#allocation6 + $0x18] sm:$0xff]
    %v1413 = vld [vmem:[#allocation6 + $0x20] sm:$0xff]
    %v1414 = vld [vmem:[#allocation6 + $0x28] sm:$0xff]
    %v1415 = vld [vmem:[#allocation6 + $0x30] sm:$0xff]
    %v1416 = vld [vmem:[#allocation6 + $0x38] sm:$0xff]
    %v1417 = vld [vmem:[#allocation6 + $0x40] sm:$0xff]
    %v1418 = vld [vmem:[#allocation6 + $0x48] sm:$0xff]
    %v1419 = vld [vmem:[#allocation6 + $0x50] sm:$0xff]
    %v1420 = vld [vmem:[#allocation6 + $0x58] sm:$0xff]
    %v1421 = vld [vmem:[#allocation6 + $0x60] sm:$0xff]
    %v1422 = vld [vmem:[#allocation6 + $0x68] sm:$0xff]
    %v1423 = vld [vmem:[#allocation6 + $0x70] sm:$0xff]
    %v1424 = vld [vmem:[#allocation6 + $0x78] sm:$0xff]
    %v1425 = vld [vmem:[#allocation6 + $0x80] sm:$0xff]
    %v1426 = vld [vmem:[#allocation6 + $0x88] sm:$0xff]
    %v1427 = vld [vmem:[#allocation6 + $0x90] sm:$0xff]
    %v1428 = vld [vmem:[#allocation6 + $0x98] sm:$0xff]
    %v1429 = vld [vmem:[#allocation6 + $0xa0] sm:$0xff]
    %v1430 = vld [vmem:[#allocation6 + $0xa8] sm:$0xff]
    %v1431 = vld [vmem:[#allocation6 + $0xb0] sm:$0xff]
    %v1432 = vld [vmem:[#allocation6 + $0xb8] sm:$0xff]
    %v1433 = vld [vmem:[#allocation6 + $0xc0] sm:$0xff]
    %v1434 = vld [vmem:[#allocation6 + $0xc8] sm:$0xff]
    %v1435 = vld [vmem:[#allocation6 + $0xd0] sm:$0xff]
    %v1436 = vld [vmem:[#allocation6 + $0xd8] sm:$0xff]
    %v1437 = vld [vmem:[#allocation6 + $0xe0] sm:$0xff]
    %v1438 = vld [vmem:[#allocation6 + $0xe8] sm:$0xff]
    %v1439 = vld [vmem:[#allocation6 + $0xf0] sm:$0xff]
    %v1440 = vld [vmem:[#allocation6 + $0xf8] sm:$0xff]
    %v1441 = vld [vmem:[#allocation6 + $0x100] sm:$0xff]
    %v1442 = vld [vmem:[#allocation6 + $0x108] sm:$0xff]
    %v1443 = vld [vmem:[#allocation6 + $0x110] sm:$0xff]
    %v1444 = vld [vmem:[#allocation6 + $0x118] sm:$0xff]
    %v1445 = vld [vmem:[#allocation6 + $0x120] sm:$0xff]
    %v1446 = vld [vmem:[#allocation6 + $0x128] sm:$0xff]
    %v1447 = vld [vmem:[#allocation6 + $0x130] sm:$0xff]
    %v1448 = vld [vmem:[#allocation6 + $0x138] sm:$0xff]
    %v1449 = vld [vmem:[#allocation6 + $0x140] sm:$0xff]
    %v1450 = vld [vmem:[#allocation6 + $0x148] sm:$0xff]
    %v1451 = vld [vmem:[#allocation6 + $0x150] sm:$0xff]
    %v1452 = vld [vmem:[#allocation6 + $0x158] sm:$0xff]
    %v1453 = vld [vmem:[#allocation6 + $0x160] sm:$0xff]
    %v1454 = vld [vmem:[#allocation6 + $0x168] sm:$0xff]
    %v1455 = vld [vmem:[#allocation6 + $0x170] sm:$0xff]
    %v1456 = vld [vmem:[#allocation6 + $0x178] sm:$0xff]
    %v1457 = vld [vmem:[#allocation6 + $0x180] sm:$0xff]
    %v1458 = vld [vmem:[#allocation6 + $0x188] sm:$0xff]
    %v1459 = vld [vmem:[#allocation6 + $0x190] sm:$0xff]
    %v1460 = vld [vmem:[#allocation6 + $0x198] sm:$0xff]
    %v1461 = vld [vmem:[#allocation6 + $0x1a0] sm:$0xff]
    %v1462 = vld [vmem:[#allocation6 + $0x1a8] sm:$0xff]
    %v1463 = vld [vmem:[#allocation6 + $0x1b0] sm:$0xff]
    %v1464 = vld [vmem:[#allocation6 + $0x1b8] sm:$0xff]
    %v1465 = vld [vmem:[#allocation6 + $0x1c0] sm:$0xff]
    %v1466 = vld [vmem:[#allocation6 + $0x1c8] sm:$0xff]
    %v1467 = vld [vmem:[#allocation6 + $0x1d0] sm:$0xff]
    %v1468 = vld [vmem:[#allocation6 + $0x1d8] sm:$0xff]
    %v1469 = vld [vmem:[#allocation6 + $0x1e0] sm:$0xff]
    %v1470 = vld [vmem:[#allocation6 + $0x1e8] sm:$0xff]
    %v1471 = vld [vmem:[#allocation6 + $0x1f0] sm:$0xff]
    %v1472 = vld [vmem:[#allocation6 + $0x1f8] sm:$0xff]
    %v1473 = vld [vmem:[#allocation6 + $0x200] sm:$0xff]
    %v1474 = vld [vmem:[#allocation6 + $0x208] sm:$0xff]
    %v1475 = vld [vmem:[#allocation6 + $0x210] sm:$0xff]
    %v1476 = vld [vmem:[#allocation6 + $0x218] sm:$0xff]
    %v1477 = vld [vmem:[#allocation6 + $0x220] sm:$0xff]
    %v1478 = vld [vmem:[#allocation6 + $0x228] sm:$0xff]
    %v1479 = vld [vmem:[#allocation6 + $0x230] sm:$0xff]
    %v1480 = vld [vmem:[#allocation6 + $0x238] sm:$0xff]
    %v1481 = vld [vmem:[#allocation6 + $0x240] sm:$0xff]
    %v1482 = vld [vmem:[#allocation6 + $0x248] sm:$0xff]
    %v1483 = vld [vmem:[#allocation6 + $0x250] sm:$0xff]
    %v1484 = vld [vmem:[#allocation6 + $0x258] sm:$0xff]
    %v1485 = vld [vmem:[#allocation6 + $0x260] sm:$0xff]
    %v1486 = vld [vmem:[#allocation6 + $0x268] sm:$0xff]
    %v1487 = vld [vmem:[#allocation6 + $0x270] sm:$0xff]
    %v1488 = vld [vmem:[#allocation6 + $0x278] sm:$0xff]
    %v1489 = vld [vmem:[#allocation6 + $0x280] sm:$0xff]
    %v1490 = vld [vmem:[#allocation6 + $0x288] sm:$0xff]
    %v1491 = vld [vmem:[#allocation6 + $0x290] sm:$0xff]
    %v1492 = vld [vmem:[#allocation6 + $0x298] sm:$0xff]
    %v1493 = vld [vmem:[#allocation6 + $0x2a0] sm:$0xff]
    %v1494 = vld [vmem:[#allocation6 + $0x2a8] sm:$0xff]
    %v1495 = vld [vmem:[#allocation6 + $0x2b0] sm:$0xff]
    %v1496 = vld [vmem:[#allocation6 + $0x2b8] sm:$0xff]
    %v1497 = vld [vmem:[#allocation6 + $0x2c0] sm:$0xff]
    %v1498 = vld [vmem:[#allocation6 + $0x2c8] sm:$0xff]
    %v1499 = vld [vmem:[#allocation6 + $0x2d0] sm:$0xff]
    %v1500 = vld [vmem:[#allocation6 + $0x2d8] sm:$0xff]
    %v1501 = vld [vmem:[#allocation6 + $0x2e0] sm:$0xff]
    %v1502 = vld [vmem:[#allocation6 + $0x2e8] sm:$0xff]
    %v1503 = vld [vmem:[#allocation6 + $0x2f0] sm:$0xff]
    %v1504 = vld [vmem:[#allocation6 + $0x2f8] sm:$0xff]
    %v1505 = vld [vmem:[#allocation6 + $0x300] sm:$0xff]
    %v1506 = vld [vmem:[#allocation6 + $0x308] sm:$0xff]
    %v1507 = vld [vmem:[#allocation6 + $0x310] sm:$0xff]
    %v1508 = vld [vmem:[#allocation6 + $0x318] sm:$0xff]
    %v1509 = vld [vmem:[#allocation6 + $0x320] sm:$0xff]
    %v1510 = vld [vmem:[#allocation6 + $0x328] sm:$0xff]
    %v1511 = vld [vmem:[#allocation6 + $0x330] sm:$0xff]
    %v1512 = vld [vmem:[#allocation6 + $0x338] sm:$0xff]
    %v1513 = vld [vmem:[#allocation6 + $0x340] sm:$0xff]
    %v1514 = vld [vmem:[#allocation6 + $0x348] sm:$0xff]
    %v1515 = vld [vmem:[#allocation6 + $0x350] sm:$0xff]
    %v1516 = vld [vmem:[#allocation6 + $0x358] sm:$0xff]
    %v1517 = vld [vmem:[#allocation6 + $0x360] sm:$0xff]
    %v1518 = vld [vmem:[#allocation6 + $0x368] sm:$0xff]
    %v1519 = vld [vmem:[#allocation6 + $0x370] sm:$0xff]
    %v1520 = vld [vmem:[#allocation6 + $0x378] sm:$0xff]
    %v1521 = vld [vmem:[#allocation6 + $0x380] sm:$0xff]
    %v1522 = vld [vmem:[#allocation6 + $0x388] sm:$0xff]
    %v1523 = vld [vmem:[#allocation6 + $0x390] sm:$0xff]
    %v1524 = vld [vmem:[#allocation6 + $0x398] sm:$0xff]
    %v1525 = vld [vmem:[#allocation6 + $0x3a0] sm:$0xff]
    %v1526 = vld [vmem:[#allocation6 + $0x3a8] sm:$0xff]
    %v1527 = vld [vmem:[#allocation6 + $0x3b0] sm:$0xff]
    %v1528 = vld [vmem:[#allocation6 + $0x3b8] sm:$0xff]
    %v1529 = vld [vmem:[#allocation6 + $0x3c0] sm:$0xff]
    %v1530 = vld [vmem:[#allocation6 + $0x3c8] sm:$0xff]
    %v1531 = vld [vmem:[#allocation6 + $0x3d0] sm:$0xff]
    %v1532 = vld [vmem:[#allocation6 + $0x3d8] sm:$0xff]
    %v1533 = vld [vmem:[#allocation6 + $0x3e0] sm:$0xff]
    %v1534 = vld [vmem:[#allocation6 + $0x3e8] sm:$0xff]
    %v1535 = vld [vmem:[#allocation6 + $0x3f0] sm:$0xff]
    %v1536 = vld [vmem:[#allocation6 + $0x3f8] sm:$0xff]
    %v1537 = vld [vmem:[%s9] sm:$0xf]
    %v1539 = vlaneseq
    %v1540 = vshrl.u32 %v1539, 7
    %v1541 = vsub.s32 0, %v1540
    %v1542 = vrot.slane %v1537, %v1541
    %v1543 = vlaneseq
    %v1544 = vshrl.u32 %v1543, 7
    %v1545 = vsub.s32 1, %v1544
    %v1546 = vrot.slane %v1537, %v1545
    %v1547 = vlaneseq
    %v1548 = vshrl.u32 %v1547, 7
    %v1549 = vsub.s32 2, %v1548
    %v1550 = vrot.slane %v1537, %v1549
    %v1551 = vlaneseq
    %v1552 = vshrl.u32 %v1551, 7
    %v1553 = vsub.s32 3, %v1552
    %v1554 = vrot.slane %v1537, %v1553
    %v1687 = vunpack.c.l.b16 %v1409
    %v1688 = vunpack.c.h.b16 %v1409
    %v1689 = vunpack.c.l.b16 %v1410
    %v1690 = vunpack.c.h.b16 %v1410
    %v1691 = vunpack.c.l.b16 %v1411
    %v1692 = vunpack.c.h.b16 %v1411
    %v1693 = vunpack.c.l.b16 %v1412
    %v1694 = vunpack.c.h.b16 %v1412
    %v1695 = vunpack.c.l.b16 %v1413
    %v1696 = vunpack.c.h.b16 %v1413
    %v1697 = vunpack.c.l.b16 %v1414
    %v1698 = vunpack.c.h.b16 %v1414
    %v1699 = vunpack.c.l.b16 %v1415
    %v1700 = vunpack.c.h.b16 %v1415
    %v1701 = vunpack.c.l.b16 %v1416
    %v1702 = vunpack.c.h.b16 %v1416
    %v1703 = vunpack.c.l.b16 %v1417
    %v1704 = vunpack.c.h.b16 %v1417
    %v1705 = vunpack.c.l.b16 %v1418
    %v1706 = vunpack.c.h.b16 %v1418
    %v1707 = vunpack.c.l.b16 %v1419
    %v1708 = vunpack.c.h.b16 %v1419
    %v1709 = vunpack.c.l.b16 %v1420
    %v1710 = vunpack.c.h.b16 %v1420
    %v1711 = vunpack.c.l.b16 %v1421
    %v1712 = vunpack.c.h.b16 %v1421
    %v1713 = vunpack.c.l.b16 %v1422
    %v1714 = vunpack.c.h.b16 %v1422
    %v1715 = vunpack.c.l.b16 %v1423
    %v1716 = vunpack.c.h.b16 %v1423
    %v1717 = vunpack.c.l.b16 %v1424
    %v1718 = vunpack.c.h.b16 %v1424
    %v1719 = vunpack.c.l.b16 %v1425
    %v1720 = vunpack.c.h.b16 %v1425
    %v1721 = vunpack.c.l.b16 %v1426
    %v1722 = vunpack.c.h.b16 %v1426
    %v1723 = vunpack.c.l.b16 %v1427
    %v1724 = vunpack.c.h.b16 %v1427
    %v1725 = vunpack.c.l.b16 %v1428
    %v1726 = vunpack.c.h.b16 %v1428
    %v1727 = vunpack.c.l.b16 %v1429
    %v1728 = vunpack.c.h.b16 %v1429
    %v1729 = vunpack.c.l.b16 %v1430
    %v1730 = vunpack.c.h.b16 %v1430
    %v1731 = vunpack.c.l.b16 %v1431
    %v1732 = vunpack.c.h.b16 %v1431
    %v1733 = vunpack.c.l.b16 %v1432
    %v1734 = vunpack.c.h.b16 %v1432
    %v1735 = vunpack.c.l.b16 %v1433
    %v1736 = vunpack.c.h.b16 %v1433
    %v1737 = vunpack.c.l.b16 %v1434
    %v1738 = vunpack.c.h.b16 %v1434
    %v1739 = vunpack.c.l.b16 %v1435
    %v1740 = vunpack.c.h.b16 %v1435
    %v1741 = vunpack.c.l.b16 %v1436
    %v1742 = vunpack.c.h.b16 %v1436
    %v1743 = vunpack.c.l.b16 %v1437
    %v1744 = vunpack.c.h.b16 %v1437
    %v1745 = vunpack.c.l.b16 %v1438
    %v1746 = vunpack.c.h.b16 %v1438
    %v1747 = vunpack.c.l.b16 %v1439
    %v1748 = vunpack.c.h.b16 %v1439
    %v1749 = vunpack.c.l.b16 %v1440
    %v1750 = vunpack.c.h.b16 %v1440
    %v1751 = vunpack.c.l.b16 %v1441
    %v1752 = vunpack.c.h.b16 %v1441
    %v1753 = vunpack.c.l.b16 %v1442
    %v1754 = vunpack.c.h.b16 %v1442
    %v1755 = vunpack.c.l.b16 %v1443
    %v1756 = vunpack.c.h.b16 %v1443
    %v1757 = vunpack.c.l.b16 %v1444
    %v1758 = vunpack.c.h.b16 %v1444
    %v1759 = vunpack.c.l.b16 %v1445
    %v1760 = vunpack.c.h.b16 %v1445
    %v1761 = vunpack.c.l.b16 %v1446
    %v1762 = vunpack.c.h.b16 %v1446
    %v1763 = vunpack.c.l.b16 %v1447
    %v1764 = vunpack.c.h.b16 %v1447
    %v1765 = vunpack.c.l.b16 %v1448
    %v1766 = vunpack.c.h.b16 %v1448
    %v1767 = vunpack.c.l.b16 %v1449
    %v1768 = vunpack.c.h.b16 %v1449
    %v1769 = vunpack.c.l.b16 %v1450
    %v1770 = vunpack.c.h.b16 %v1450
    %v1771 = vunpack.c.l.b16 %v1451
    %v1772 = vunpack.c.h.b16 %v1451
    %v1773 = vunpack.c.l.b16 %v1452
    %v1774 = vunpack.c.h.b16 %v1452
    %v1775 = vunpack.c.l.b16 %v1453
    %v1776 = vunpack.c.h.b16 %v1453
    %v1777 = vunpack.c.l.b16 %v1454
    %v1778 = vunpack.c.h.b16 %v1454
    %v1779 = vunpack.c.l.b16 %v1455
    %v1780 = vunpack.c.h.b16 %v1455
    %v1781 = vunpack.c.l.b16 %v1456
    %v1782 = vunpack.c.h.b16 %v1456
    %v1783 = vunpack.c.l.b16 %v1457
    %v1784 = vunpack.c.h.b16 %v1457
    %v1785 = vunpack.c.l.b16 %v1458
    %v1786 = vunpack.c.h.b16 %v1458
    %v1787 = vunpack.c.l.b16 %v1459
    %v1788 = vunpack.c.h.b16 %v1459
    %v1789 = vunpack.c.l.b16 %v1460
    %v1790 = vunpack.c.h.b16 %v1460
    %v1791 = vunpack.c.l.b16 %v1461
    %v1792 = vunpack.c.h.b16 %v1461
    %v1793 = vunpack.c.l.b16 %v1462
    %v1794 = vunpack.c.h.b16 %v1462
    %v1795 = vunpack.c.l.b16 %v1463
    %v1796 = vunpack.c.h.b16 %v1463
    %v1797 = vunpack.c.l.b16 %v1464
    %v1798 = vunpack.c.h.b16 %v1464
    %v1799 = vunpack.c.l.b16 %v1465
    %v1800 = vunpack.c.h.b16 %v1465
    %v1801 = vunpack.c.l.b16 %v1466
    %v1802 = vunpack.c.h.b16 %v1466
    %v1803 = vunpack.c.l.b16 %v1467
    %v1804 = vunpack.c.h.b16 %v1467
    %v1805 = vunpack.c.l.b16 %v1468
    %v1806 = vunpack.c.h.b16 %v1468
    %v1807 = vunpack.c.l.b16 %v1469
    %v1808 = vunpack.c.h.b16 %v1469
    %v1809 = vunpack.c.l.b16 %v1470
    %v1810 = vunpack.c.h.b16 %v1470
    %v1811 = vunpack.c.l.b16 %v1471
    %v1812 = vunpack.c.h.b16 %v1471
    %v1813 = vunpack.c.l.b16 %v1472
    %v1814 = vunpack.c.h.b16 %v1472
    %v1815 = vunpack.c.l.b16 %v1473
    %v1816 = vunpack.c.h.b16 %v1473
    %v1817 = vunpack.c.l.b16 %v1474
    %v1818 = vunpack.c.h.b16 %v1474
    %v1819 = vunpack.c.l.b16 %v1475
    %v1820 = vunpack.c.h.b16 %v1475
    %v1821 = vunpack.c.l.b16 %v1476
    %v1822 = vunpack.c.h.b16 %v1476
    %v1823 = vunpack.c.l.b16 %v1477
    %v1824 = vunpack.c.h.b16 %v1477
    %v1825 = vunpack.c.l.b16 %v1478
    %v1826 = vunpack.c.h.b16 %v1478
    %v1827 = vunpack.c.l.b16 %v1479
    %v1828 = vunpack.c.h.b16 %v1479
    %v1829 = vunpack.c.l.b16 %v1480
    %v1830 = vunpack.c.h.b16 %v1480
    %v1831 = vunpack.c.l.b16 %v1481
    %v1832 = vunpack.c.h.b16 %v1481
    %v1833 = vunpack.c.l.b16 %v1482
    %v1834 = vunpack.c.h.b16 %v1482
    %v1835 = vunpack.c.l.b16 %v1483
    %v1836 = vunpack.c.h.b16 %v1483
    %v1837 = vunpack.c.l.b16 %v1484
    %v1838 = vunpack.c.h.b16 %v1484
    %v1839 = vunpack.c.l.b16 %v1485
    %v1840 = vunpack.c.h.b16 %v1485
    %v1841 = vunpack.c.l.b16 %v1486
    %v1842 = vunpack.c.h.b16 %v1486
    %v1843 = vunpack.c.l.b16 %v1487
    %v1844 = vunpack.c.h.b16 %v1487
    %v1845 = vunpack.c.l.b16 %v1488
    %v1846 = vunpack.c.h.b16 %v1488
    %v1847 = vunpack.c.l.b16 %v1489
    %v1848 = vunpack.c.h.b16 %v1489
    %v1849 = vunpack.c.l.b16 %v1490
    %v1850 = vunpack.c.h.b16 %v1490
    %v1851 = vunpack.c.l.b16 %v1491
    %v1852 = vunpack.c.h.b16 %v1491
    %v1853 = vunpack.c.l.b16 %v1492
    %v1854 = vunpack.c.h.b16 %v1492
    %v1855 = vunpack.c.l.b16 %v1493
    %v1856 = vunpack.c.h.b16 %v1493
    %v1857 = vunpack.c.l.b16 %v1494
    %v1858 = vunpack.c.h.b16 %v1494
    %v1859 = vunpack.c.l.b16 %v1495
    %v1860 = vunpack.c.h.b16 %v1495
    %v1861 = vunpack.c.l.b16 %v1496
    %v1862 = vunpack.c.h.b16 %v1496
    %v1863 = vunpack.c.l.b16 %v1497
    %v1864 = vunpack.c.h.b16 %v1497
    %v1865 = vunpack.c.l.b16 %v1498
    %v1866 = vunpack.c.h.b16 %v1498
    %v1867 = vunpack.c.l.b16 %v1499
    %v1868 = vunpack.c.h.b16 %v1499
    %v1869 = vunpack.c.l.b16 %v1500
    %v1870 = vunpack.c.h.b16 %v1500
    %v1871 = vunpack.c.l.b16 %v1501
    %v1872 = vunpack.c.h.b16 %v1501
    %v1873 = vunpack.c.l.b16 %v1502
    %v1874 = vunpack.c.h.b16 %v1502
    %v1875 = vunpack.c.l.b16 %v1503
    %v1876 = vunpack.c.h.b16 %v1503
    %v1877 = vunpack.c.l.b16 %v1504
    %v1878 = vunpack.c.h.b16 %v1504
    %v1879 = vunpack.c.l.b16 %v1505
    %v1880 = vunpack.c.h.b16 %v1505
    %v1881 = vunpack.c.l.b16 %v1506
    %v1882 = vunpack.c.h.b16 %v1506
    %v1883 = vunpack.c.l.b16 %v1507
    %v1884 = vunpack.c.h.b16 %v1507
    %v1885 = vunpack.c.l.b16 %v1508
    %v1886 = vunpack.c.h.b16 %v1508
    %v1887 = vunpack.c.l.b16 %v1509
    %v1888 = vunpack.c.h.b16 %v1509
    %v1889 = vunpack.c.l.b16 %v1510
    %v1890 = vunpack.c.h.b16 %v1510
    %v1891 = vunpack.c.l.b16 %v1511
    %v1892 = vunpack.c.h.b16 %v1511
    %v1893 = vunpack.c.l.b16 %v1512
    %v1894 = vunpack.c.h.b16 %v1512
    %v1895 = vunpack.c.l.b16 %v1513
    %v1896 = vunpack.c.h.b16 %v1513
    %v1897 = vunpack.c.l.b16 %v1514
    %v1898 = vunpack.c.h.b16 %v1514
    %v1899 = vunpack.c.l.b16 %v1515
    %v1900 = vunpack.c.h.b16 %v1515
    %v1901 = vunpack.c.l.b16 %v1516
    %v1902 = vunpack.c.h.b16 %v1516
    %v1903 = vunpack.c.l.b16 %v1517
    %v1904 = vunpack.c.h.b16 %v1517
    %v1905 = vunpack.c.l.b16 %v1518
    %v1906 = vunpack.c.h.b16 %v1518
    %v1907 = vunpack.c.l.b16 %v1519
    %v1908 = vunpack.c.h.b16 %v1519
    %v1909 = vunpack.c.l.b16 %v1520
    %v1910 = vunpack.c.h.b16 %v1520
    %v1911 = vunpack.c.l.b16 %v1521
    %v1912 = vunpack.c.h.b16 %v1521
    %v1913 = vunpack.c.l.b16 %v1522
    %v1914 = vunpack.c.h.b16 %v1522
    %v1915 = vunpack.c.l.b16 %v1523
    %v1916 = vunpack.c.h.b16 %v1523
    %v1917 = vunpack.c.l.b16 %v1524
    %v1918 = vunpack.c.h.b16 %v1524
    %v1919 = vunpack.c.l.b16 %v1525
    %v1920 = vunpack.c.h.b16 %v1525
    %v1921 = vunpack.c.l.b16 %v1526
    %v1922 = vunpack.c.h.b16 %v1526
    %v1923 = vunpack.c.l.b16 %v1527
    %v1924 = vunpack.c.h.b16 %v1527
    %v1925 = vunpack.c.l.b16 %v1528
    %v1926 = vunpack.c.h.b16 %v1528
    %v1927 = vunpack.c.l.b16 %v1529
    %v1928 = vunpack.c.h.b16 %v1529
    %v1929 = vunpack.c.l.b16 %v1530
    %v1930 = vunpack.c.h.b16 %v1530
    %v1931 = vunpack.c.l.b16 %v1531
    %v1932 = vunpack.c.h.b16 %v1531
    %v1933 = vunpack.c.l.b16 %v1532
    %v1934 = vunpack.c.h.b16 %v1532
    %v1935 = vunpack.c.l.b16 %v1533
    %v1936 = vunpack.c.h.b16 %v1533
    %v1937 = vunpack.c.l.b16 %v1534
    %v1938 = vunpack.c.h.b16 %v1534
    %v1939 = vunpack.c.l.b16 %v1535
    %v1940 = vunpack.c.h.b16 %v1535
    %v1941 = vunpack.c.l.b16 %v1536
    %v1942 = vunpack.c.h.b16 %v1536
    %v1943 = vpack.c.b16 %v1691, %v1687
    %v1944 = vpack.c.b16 %v1692, %v1688
    %v1945 = vpack.c.b16 %v1693, %v1689
    %v1946 = vpack.c.b16 %v1694, %v1690
    %v1947 = vpack.c.b16 %v1699, %v1695
    %v1948 = vpack.c.b16 %v1700, %v1696
    %v1949 = vpack.c.b16 %v1701, %v1697
    %v1950 = vpack.c.b16 %v1702, %v1698
    %v1951 = vpack.c.b16 %v1707, %v1703
    %v1952 = vpack.c.b16 %v1708, %v1704
    %v1953 = vpack.c.b16 %v1709, %v1705
    %v1954 = vpack.c.b16 %v1710, %v1706
    %v1955 = vpack.c.b16 %v1715, %v1711
    %v1956 = vpack.c.b16 %v1716, %v1712
    %v1957 = vpack.c.b16 %v1717, %v1713
    %v1958 = vpack.c.b16 %v1718, %v1714
    %v1959 = vpack.c.b16 %v1723, %v1719
    %v1960 = vpack.c.b16 %v1724, %v1720
    %v1961 = vpack.c.b16 %v1725, %v1721
    %v1962 = vpack.c.b16 %v1726, %v1722
    %v1963 = vpack.c.b16 %v1731, %v1727
    %v1964 = vpack.c.b16 %v1732, %v1728
    %v1965 = vpack.c.b16 %v1733, %v1729
    %v1966 = vpack.c.b16 %v1734, %v1730
    %v1967 = vpack.c.b16 %v1739, %v1735
    %v1968 = vpack.c.b16 %v1740, %v1736
    %v1969 = vpack.c.b16 %v1741, %v1737
    %v1970 = vpack.c.b16 %v1742, %v1738
    %v1971 = vpack.c.b16 %v1747, %v1743
    %v1972 = vpack.c.b16 %v1748, %v1744
    %v1973 = vpack.c.b16 %v1749, %v1745
    %v1974 = vpack.c.b16 %v1750, %v1746
    %v1975 = vpack.c.b16 %v1755, %v1751
    %v1976 = vpack.c.b16 %v1756, %v1752
    %v1977 = vpack.c.b16 %v1757, %v1753
    %v1978 = vpack.c.b16 %v1758, %v1754
    %v1979 = vpack.c.b16 %v1763, %v1759
    %v1980 = vpack.c.b16 %v1764, %v1760
    %v1981 = vpack.c.b16 %v1765, %v1761
    %v1982 = vpack.c.b16 %v1766, %v1762
    %v1983 = vpack.c.b16 %v1771, %v1767
    %v1984 = vpack.c.b16 %v1772, %v1768
    %v1985 = vpack.c.b16 %v1773, %v1769
    %v1986 = vpack.c.b16 %v1774, %v1770
    %v1987 = vpack.c.b16 %v1779, %v1775
    %v1988 = vpack.c.b16 %v1780, %v1776
    %v1989 = vpack.c.b16 %v1781, %v1777
    %v1990 = vpack.c.b16 %v1782, %v1778
    %v1991 = vpack.c.b16 %v1787, %v1783
    %v1992 = vpack.c.b16 %v1788, %v1784
    %v1993 = vpack.c.b16 %v1789, %v1785
    %v1994 = vpack.c.b16 %v1790, %v1786
    %v1995 = vpack.c.b16 %v1795, %v1791
    %v1996 = vpack.c.b16 %v1796, %v1792
    %v1997 = vpack.c.b16 %v1797, %v1793
    %v1998 = vpack.c.b16 %v1798, %v1794
    %v1999 = vpack.c.b16 %v1803, %v1799
    %v2000 = vpack.c.b16 %v1804, %v1800
    %v2001 = vpack.c.b16 %v1805, %v1801
    %v2002 = vpack.c.b16 %v1806, %v1802
    %v2003 = vpack.c.b16 %v1811, %v1807
    %v2004 = vpack.c.b16 %v1812, %v1808
    %v2005 = vpack.c.b16 %v1813, %v1809
    %v2006 = vpack.c.b16 %v1814, %v1810
    %v2007 = vpack.c.b16 %v1819, %v1815
    %v2008 = vpack.c.b16 %v1820, %v1816
    %v2009 = vpack.c.b16 %v1821, %v1817
    %v2010 = vpack.c.b16 %v1822, %v1818
    %v2011 = vpack.c.b16 %v1827, %v1823
    %v2012 = vpack.c.b16 %v1828, %v1824
    %v2013 = vpack.c.b16 %v1829, %v1825
    %v2014 = vpack.c.b16 %v1830, %v1826
    %v2015 = vpack.c.b16 %v1835, %v1831
    %v2016 = vpack.c.b16 %v1836, %v1832
    %v2017 = vpack.c.b16 %v1837, %v1833
    %v2018 = vpack.c.b16 %v1838, %v1834
    %v2019 = vpack.c.b16 %v1843, %v1839
    %v2020 = vpack.c.b16 %v1844, %v1840
    %v2021 = vpack.c.b16 %v1845, %v1841
    %v2022 = vpack.c.b16 %v1846, %v1842
    %v2023 = vpack.c.b16 %v1851, %v1847
    %v2024 = vpack.c.b16 %v1852, %v1848
    %v2025 = vpack.c.b16 %v1853, %v1849
    %v2026 = vpack.c.b16 %v1854, %v1850
    %v2027 = vpack.c.b16 %v1859, %v1855
    %v2028 = vpack.c.b16 %v1860, %v1856
    %v2029 = vpack.c.b16 %v1861, %v1857
    %v2030 = vpack.c.b16 %v1862, %v1858
    %v2031 = vpack.c.b16 %v1867, %v1863
    %v2032 = vpack.c.b16 %v1868, %v1864
    %v2033 = vpack.c.b16 %v1869, %v1865
    %v2034 = vpack.c.b16 %v1870, %v1866
    %v2035 = vpack.c.b16 %v1875, %v1871
    %v2036 = vpack.c.b16 %v1876, %v1872
    %v2037 = vpack.c.b16 %v1877, %v1873
    %v2038 = vpack.c.b16 %v1878, %v1874
    %v2039 = vpack.c.b16 %v1883, %v1879
    %v2040 = vpack.c.b16 %v1884, %v1880
    %v2041 = vpack.c.b16 %v1885, %v1881
    %v2042 = vpack.c.b16 %v1886, %v1882
    %v2043 = vpack.c.b16 %v1891, %v1887
    %v2044 = vpack.c.b16 %v1892, %v1888
    %v2045 = vpack.c.b16 %v1893, %v1889
    %v2046 = vpack.c.b16 %v1894, %v1890
    %v2047 = vpack.c.b16 %v1899, %v1895
    %v2048 = vpack.c.b16 %v1900, %v1896
    %v2049 = vpack.c.b16 %v1901, %v1897
    %v2050 = vpack.c.b16 %v1902, %v1898
    %v2051 = vpack.c.b16 %v1907, %v1903
    %v2052 = vpack.c.b16 %v1908, %v1904
    %v2053 = vpack.c.b16 %v1909, %v1905
    %v2054 = vpack.c.b16 %v1910, %v1906
    %v2055 = vpack.c.b16 %v1915, %v1911
    %v2056 = vpack.c.b16 %v1916, %v1912
    %v2057 = vpack.c.b16 %v1917, %v1913
    %v2058 = vpack.c.b16 %v1918, %v1914
    %v2059 = vpack.c.b16 %v1923, %v1919
    %v2060 = vpack.c.b16 %v1924, %v1920
    %v2061 = vpack.c.b16 %v1925, %v1921
    %v2062 = vpack.c.b16 %v1926, %v1922
    %v2063 = vpack.c.b16 %v1931, %v1927
    %v2064 = vpack.c.b16 %v1932, %v1928
    %v2065 = vpack.c.b16 %v1933, %v1929
    %v2066 = vpack.c.b16 %v1934, %v1930
    %v2067 = vpack.c.b16 %v1939, %v1935
    %v2068 = vpack.c.b16 %v1940, %v1936
    %v2069 = vpack.c.b16 %v1941, %v1937
    %v2070 = vpack.c.b16 %v1942, %v1938
    %2199 = vmatprep.subr.bf16.mxu0 %v1944
    %2200 = vmatpush1.bf16.msra.mxu0 %v1943
    %2201 = vmatprep.subr.bf16.mxu0 %v1948
    %2202 = vmatpush1.bf16.msra.mxu0 %v1947
    %2203 = vmatprep.subr.bf16.mxu0 %v1952
    %2204 = vmatpush1.bf16.msra.mxu0 %v1951
    %2205 = vmatprep.subr.bf16.mxu0 %v1956
    %2206 = vmatpush1.bf16.msra.mxu0 %v1955
    %2207 = vmatprep.subr.bf16.mxu0 %v1960
    %2208 = vmatpush1.bf16.msra.mxu0 %v1959
    %2209 = vmatprep.subr.bf16.mxu0 %v1964
    %2210 = vmatpush1.bf16.msra.mxu0 %v1963
    %2211 = vmatprep.subr.bf16.mxu0 %v1968
    %2212 = vmatpush1.bf16.msra.mxu0 %v1967
    %2213 = vmatprep.subr.bf16.mxu0 %v1972
    %2214 = vmatpush1.bf16.msra.mxu0 %v1971
    %2215 = vmatprep.subr.bf16.mxu0 %v1976
    %2216 = vmatpush1.bf16.msra.mxu0 %v1975
    %2217 = vmatprep.subr.bf16.mxu0 %v1980
    %2218 = vmatpush1.bf16.msra.mxu0 %v1979
    %2219 = vmatprep.subr.bf16.mxu0 %v1984
    %2220 = vmatpush1.bf16.msra.mxu0 %v1983
    %2221 = vmatprep.subr.bf16.mxu0 %v1988
    %2222 = vmatpush1.bf16.msra.mxu0 %v1987
    %2223 = vmatprep.subr.bf16.mxu0 %v1992
    %2224 = vmatpush1.bf16.msra.mxu0 %v1991
    %2225 = vmatprep.subr.bf16.mxu0 %v1996
    %2226 = vmatpush1.bf16.msra.mxu0 %v1995
    %2227 = vmatprep.subr.bf16.mxu0 %v2000
    %2228 = vmatpush1.bf16.msra.mxu0 %v1999
    %2229 = vmatprep.subr.bf16.mxu0 %v2004
    %2230 = vmatpush1.bf16.msra.mxu0 %v2003
    %2231 = vmatprep.mubr.bf16.mxu0 %v1406
    %2232 = vmatmul.mubr.bf16.gmra.mrb[0].mxu0 %v1405
    %v2233 = vpop.f32.mrb[0].mxu0
    %v2234 = vadd.f32 %v1542, %v2233
    %v2235 = vpop.f32.mrb[0].mxu0
    %v2236 = vadd.f32 %v1546, %v2235
    %v2237 = vpop.f32.mrb[0].mxu0
    %v2238 = vadd.f32 %v1542, %v2237
    %v2239 = vpop.f32.mrb[0].mxu0
    %v2240 = vadd.f32 %v1546, %v2239
    %2241 = vdwg.mxu0
    %2242 = vmatprep.subr.bf16.mxu0 %v2008
    %2243 = vmatpush1.bf16.msra.mxu0 %v2007
    %2244 = vmatprep.subr.bf16.mxu0 %v2012
    %2245 = vmatpush1.bf16.msra.mxu0 %v2011
    %2246 = vmatprep.subr.bf16.mxu0 %v2016
    %2247 = vmatpush1.bf16.msra.mxu0 %v2015
    %2248 = vmatprep.subr.bf16.mxu0 %v2020
    %2249 = vmatpush1.bf16.msra.mxu0 %v2019
    %2250 = vmatprep.subr.bf16.mxu0 %v2024
    %2251 = vmatpush1.bf16.msra.mxu0 %v2023
    %2252 = vmatprep.subr.bf16.mxu0 %v2028
    %2253 = vmatpush1.bf16.msra.mxu0 %v2027
    %2254 = vmatprep.subr.bf16.mxu0 %v2032
    %2255 = vmatpush1.bf16.msra.mxu0 %v2031
    %2256 = vmatprep.subr.bf16.mxu0 %v2036
    %2257 = vmatpush1.bf16.msra.mxu0 %v2035
    %2258 = vmatprep.subr.bf16.mxu0 %v2040
    %2259 = vmatpush1.bf16.msra.mxu0 %v2039
    %2260 = vmatprep.subr.bf16.mxu0 %v2044
    %2261 = vmatpush1.bf16.msra.mxu0 %v2043
    %2262 = vmatprep.subr.bf16.mxu0 %v2048
    %2263 = vmatpush1.bf16.msra.mxu0 %v2047
    %2264 = vmatprep.subr.bf16.mxu0 %v2052
    %2265 = vmatpush1.bf16.msra.mxu0 %v2051
    %2266 = vmatprep.subr.bf16.mxu0 %v2056
    %2267 = vmatpush1.bf16.msra.mxu0 %v2055
    %2268 = vmatprep.subr.bf16.mxu0 %v2060
    %2269 = vmatpush1.bf16.msra.mxu0 %v2059
    %2270 = vmatprep.subr.bf16.mxu0 %v2064
    %2271 = vmatpush1.bf16.msra.mxu0 %v2063
    %2272 = vmatprep.subr.bf16.mxu0 %v2068
    %2273 = vmatpush1.bf16.msra.mxu0 %v2067
    %2274 = vmatprep.mubr.bf16.mxu0 %v1408
    %2275 = vmatmul.mubr.bf16.gmra.mrb[0].mxu0 %v1407
    %v2276 = vpop.f32.mrb[0].mxu0
    %v2277 = vadd.f32 %v2234, %v2276
    %v2278 = vpop.f32.mrb[0].mxu0
    %v2279 = vadd.f32 %v2236, %v2278
    %v2280 = vpop.f32.mrb[0].mxu0
    %v2281 = vadd.f32 %v2238, %v2280
    %v2282 = vpop.f32.mrb[0].mxu0
    %v2283 = vadd.f32 %v2240, %v2282
    %2284 = vdwg.mxu0
    %2285 = vmatprep.subr.bf16.mxu0 %v1946
    %2286 = vmatpush1.bf16.msra.mxu0 %v1945
    %2287 = vmatprep.subr.bf16.mxu0 %v1950
    %2288 = vmatpush1.bf16.msra.mxu0 %v1949
    %2289 = vmatprep.subr.bf16.mxu0 %v1954
    %2290 = vmatpush1.bf16.msra.mxu0 %v1953
    %2291 = vmatprep.subr.bf16.mxu0 %v1958
    %2292 = vmatpush1.bf16.msra.mxu0 %v1957
    %2293 = vmatprep.subr.bf16.mxu0 %v1962
    %2294 = vmatpush1.bf16.msra.mxu0 %v1961
    %2295 = vmatprep.subr.bf16.mxu0 %v1966
    %2296 = vmatpush1.bf16.msra.mxu0 %v1965
    %2297 = vmatprep.subr.bf16.mxu0 %v1970
    %2298 = vmatpush1.bf16.msra.mxu0 %v1969
    %2299 = vmatprep.subr.bf16.mxu0 %v1974
    %2300 = vmatpush1.bf16.msra.mxu0 %v1973
    %2301 = vmatprep.subr.bf16.mxu0 %v1978
    %2302 = vmatpush1.bf16.msra.mxu0 %v1977
    %2303 = vmatprep.subr.bf16.mxu0 %v1982
    %2304 = vmatpush1.bf16.msra.mxu0 %v1981
    %2305 = vmatprep.subr.bf16.mxu0 %v1986
    %2306 = vmatpush1.bf16.msra.mxu0 %v1985
    %2307 = vmatprep.subr.bf16.mxu0 %v1990
    %2308 = vmatpush1.bf16.msra.mxu0 %v1989
    %2309 = vmatprep.subr.bf16.mxu0 %v1994
    %2310 = vmatpush1.bf16.msra.mxu0 %v1993
    %2311 = vmatprep.subr.bf16.mxu0 %v1998
    %2312 = vmatpush1.bf16.msra.mxu0 %v1997
    %2313 = vmatprep.subr.bf16.mxu0 %v2002
    %2314 = vmatpush1.bf16.msra.mxu0 %v2001
    %2315 = vmatprep.subr.bf16.mxu0 %v2006
    %2316 = vmatpush1.bf16.msra.mxu0 %v2005
    %2317 = vmatprep.mubr.bf16.mxu0 %v1406
    %2318 = vmatmul.mubr.bf16.gmra.mrb[0].mxu0 %v1405
    %v2319 = vpop.f32.mrb[0].mxu0
    %v2320 = vadd.f32 %v1550, %v2319
    %v2321 = vpop.f32.mrb[0].mxu0
    %v2322 = vadd.f32 %v1554, %v2321
    %v2323 = vpop.f32.mrb[0].mxu0
    %v2324 = vadd.f32 %v1550, %v2323
    %v2325 = vpop.f32.mrb[0].mxu0
    %v2326 = vadd.f32 %v1554, %v2325
    %2327 = vdwg.mxu0
    %2328 = vmatprep.subr.bf16.mxu0 %v2010
    %2329 = vmatpush1.bf16.msra.mxu0 %v2009
    %2330 = vmatprep.subr.bf16.mxu0 %v2014
    %2331 = vmatpush1.bf16.msra.mxu0 %v2013
    %2332 = vmatprep.subr.bf16.mxu0 %v2018
    %2333 = vmatpush1.bf16.msra.mxu0 %v2017
    %2334 = vmatprep.subr.bf16.mxu0 %v2022
    %2335 = vmatpush1.bf16.msra.mxu0 %v2021
    %2336 = vmatprep.subr.bf16.mxu0 %v2026
    %2337 = vmatpush1.bf16.msra.mxu0 %v2025
    %2338 = vmatprep.subr.bf16.mxu0 %v2030
    %2339 = vmatpush1.bf16.msra.mxu0 %v2029
    %2340 = vmatprep.subr.bf16.mxu0 %v2034
    %2341 = vmatpush1.bf16.msra.mxu0 %v2033
    %2342 = vmatprep.subr.bf16.mxu0 %v2038
    %2343 = vmatpush1.bf16.msra.mxu0 %v2037
    %2344 = vmatprep.subr.bf16.mxu0 %v2042
    %2345 = vmatpush1.bf16.msra.mxu0 %v2041
    %2346 = vmatprep.subr.bf16.mxu0 %v2046
    %2347 = vmatpush1.bf16.msra.mxu0 %v2045
    %2348 = vmatprep.subr.bf16.mxu0 %v2050
    %2349 = vmatpush1.bf16.msra.mxu0 %v2049
    %2350 = vmatprep.subr.bf16.mxu0 %v2054
    %2351 = vmatpush1.bf16.msra.mxu0 %v2053
    %2352 = vmatprep.subr.bf16.mxu0 %v2058
    %2353 = vmatpush1.bf16.msra.mxu0 %v2057
    %2354 = vmatprep.subr.bf16.mxu0 %v2062
    %2355 = vmatpush1.bf16.msra.mxu0 %v2061
    %2356 = vmatprep.subr.bf16.mxu0 %v2066
    %2357 = vmatpush1.bf16.msra.mxu0 %v2065
    %2358 = vmatprep.subr.bf16.mxu0 %v2070
    %2359 = vmatpush1.bf16.msra.mxu0 %v2069
    %2360 = vmatprep.mubr.bf16.mxu0 %v1408
    %2361 = vmatmul.mubr.bf16.gmra.mrb[0].mxu0 %v1407
    %v2362 = vpop.f32.mrb[0].mxu0
    %v2363 = vadd.f32 %v2320, %v2362
    %v2364 = vpop.f32.mrb[0].mxu0
    %v2365 = vadd.f32 %v2322, %v2364
    %v2366 = vpop.f32.mrb[0].mxu0
    %v2367 = vadd.f32 %v2324, %v2366
    %v2368 = vpop.f32.mrb[0].mxu0
    %v2369 = vadd.f32 %v2326, %v2368
    %2370 = vdwg.mxu0
    %v2371 = vmax.f32 %v2277, 0.0
    %v2372 = vmax.f32 %v2279, 0.0
    %v2373 = vmax.f32 %v2363, 0.0
    %v2374 = vmax.f32 %v2365, 0.0
    %v2375 = vmax.f32 %v2281, 0.0
    %v2376 = vmax.f32 %v2283, 0.0
    %v2377 = vmax.f32 %v2367, 0.0
    %v2378 = vmax.f32 %v2369, 0.0
    %v2379 = vld [vmem:[%s10] sm:$0xf]
    %v2381 = vlaneseq
    %v2382 = vshrl.u32 %v2381, 7
    %v2383 = vsub.s32 0, %v2382
    %v2384 = vrot.slane %v2379, %v2383
    %v2385 = vlaneseq
    %v2386 = vshrl.u32 %v2385, 7
    %v2387 = vsub.s32 1, %v2386
    %v2388 = vrot.slane %v2379, %v2387
    %v2389 = vlaneseq
    %v2390 = vshrl.u32 %v2389, 7
    %v2391 = vsub.s32 2, %v2390
    %v2392 = vrot.slane %v2379, %v2391
    %v2393 = vlaneseq
    %v2394 = vshrl.u32 %v2393, 7
    %v2395 = vsub.s32 3, %v2394
    %v2396 = vrot.slane %v2379, %v2395
    %v2401 = vmul.f32 %v2371, %v2384
    %v2402 = vmul.f32 %v2372, %v2388
    %v2403 = vmul.f32 %v2373, %v2392
    %v2404 = vmul.f32 %v2374, %v2396
    %v2405 = vmul.f32 %v2375, %v2384
    %v2406 = vmul.f32 %v2376, %v2388
    %v2407 = vmul.f32 %v2377, %v2392
    %v2408 = vmul.f32 %v2378, %v2396
    %v2409 = vadd.f32 %v2401, %v2402
    %v2410 = vadd.f32 %v2409, %v2403
    %v2411 = vadd.f32 %v2410, %v2404
    %2412 = vadd.xlane.f32.xlu0 %v2411
    %v2413 = vpop.xlane.xlu0 %2412
    %v2414 = vadd.f32 %v2405, %v2406
    %v2415 = vadd.f32 %v2414, %v2407
    %v2416 = vadd.f32 %v2415, %v2408
    %2417 = vadd.xlane.f32.xlu0 %v2416
    %v2418 = vpop.xlane.xlu0 %2417
    %v2419 = vld [vmem:[#allocation2] sm:$0x1]
    %v2421 = vlaneseq
    %v2422 = vshrl.u32 %v2421, 7
    %v2423 = vsub.s32 0, %v2422
    %v2424 = vrot.slane %v2419, %v2423
    %v2426 = vadd.f32 %v2413, %v2424
    %v2427 = vadd.f32 %v2418, %v2424
    %v2428 = vlaneseq
    %v2429 = vshrl.u32 %v2428, 7
    %s2430 = smul.u32 0, 8
    %v2431 = vstv %s2430
    %v2432 = vadd.s32 %v2429, %v2431
    %vm2433 = vcmp.lt.s32.totalorder %v2432, 8
    %v2434 = vsel %vm2433, %v2426, 0.0
    %vm2435 = vcmask 7168
    %v2436 = vsel %vm2435, %v2434, 0.0
    %2437 = vadd.xlane.f32.xlu0 %v2436
    %v2438 = vpop.xlane.xlu0 %2437
    %v2439 = vrot.slane %v2438, 4
    %v2440 = vadd.f32 %v2438, %v2439
    %v2441 = vrot.slane %v2440, 2
    %v2442 = vadd.f32 %v2440, %v2441
    %v2443 = vrot.slane %v2442, 1
    %v2444 = vadd.f32 %v2442, %v2443
    %s2445 = vtos %v2444
    %v2446 = vstv %s2445
    %vm2447 = vcmask 0
    %2448 = vst.msk [vmem:[#allocation8] sm:$0x1] %vm2447, %v2446
    %v2449 = vsel %vm2433, %v2427, -1e+30
    %v2450 = vsel %vm2435, %v2449, -inf
    %2451 = vmax.xlane.f32.xlu0 %v2450
    %v2452 = vpop.xlane.xlu0 %2451
    %v2453 = vrot.slane %v2452, 4
    %v2454 = vmax.f32 %v2452, %v2453
    %v2455 = vrot.slane %v2454, 2
    %v2456 = vmax.f32 %v2454, %v2455
    %v2457 = vrot.slane %v2456, 1
    %v2458 = vmax.f32 %v2456, %v2457
    %s2459 = vtos %v2458
    %v2460 = vstv %s2459
    %v2461 = vsub.f32 %v2449, %v2460
    %v2462 = vmul.f32 %v2461, 1.442695
    %v2463 = vpow.pop %v2462
    %v2464 = vsel %vm2435, %v2463, 0.0
    %2465 = vadd.xlane.f32.xlu0 %v2464
    %v2466 = vpop.xlane.xlu0 %2465
    %v2467 = vrot.slane %v2466, 4
    %v2468 = vadd.f32 %v2466, %v2467
    %v2469 = vrot.slane %v2468, 2
    %v2470 = vadd.f32 %v2468, %v2469
    %v2471 = vrot.slane %v2470, 1
    %v2472 = vadd.f32 %v2470, %v2471
    %s2473 = vtos %v2472
    %v2474 = vstv %s2473
    %2475 = vst.msk [vmem:[#allocation11] sm:$0x1] %vm2447, %v2474
    %2476 = vst.msk [vmem:[#allocation9] sm:$0x1] %vm2447, %v2460
    // Predicated region
    $region58: #{mine_forward.1} parent=1 // pred_check
      _
    $region59: #{mine_forward.1} parent=1 // pred_check_branch
      %2478 = sbr.rel (0) target = $region61
    $region60: #{mine_forward.1} parent=1 // pred_region
      %s2480 = ssub.s32 16, 16
      %2481 = vsyncadd [#allocation5], %s2480
      %s2483 = sshll.u32 [#allocation8], 4
      %s2484 = int_to_ptr.vmem [resolvable:$true] %s2483
      %2486 = dma.vmem_to_hbm [thread:$0]  %s2484, 16, %s12, [#allocation5]
    $region61: #{mine_forward.1} parent=1 // pred_fallthru
      _
    // Predicated region
    $region62: #{mine_forward.1} parent=1 // pred_check
      _
    $region63: #{mine_forward.1} parent=1 // pred_check_branch
      %2488 = sbr.rel (0) target = $region65
    $region64: #{mine_forward.1} parent=1 // pred_region
      %s2490 = ssub.s32 16, 16
      %2491 = vsyncadd [#allocation10], %s2490
      %s2493 = sshll.u32 [#allocation9], 4
      %s2494 = int_to_ptr.vmem [resolvable:$true] %s2493
      %2496 = dma.vmem_to_hbm [thread:$0]  %s2494, 16, %s13, [#allocation10]
    $region65: #{mine_forward.1} parent=1 // pred_fallthru
      _
    // Predicated region
    $region66: #{mine_forward.1} parent=1 // pred_check
      _
    $region67: #{mine_forward.1} parent=1 // pred_check_branch
      %2498 = sbr.rel (0) target = $region69
    $region68: #{mine_forward.1} parent=1 // pred_region
      %s2500 = ssub.s32 16, 16
      %2501 = vsyncadd [#allocation10], %s2500
      %s2503 = sshll.u32 [#allocation11], 4
      %s2504 = int_to_ptr.vmem [resolvable:$true] %s2503
      %2506 = dma.vmem_to_hbm [thread:$0]  %s2504, 16, %s14, [#allocation10]
    $region69: #{mine_forward.1} parent=1 // pred_fallthru
      _
    // Predicated region
    $region70: #{mine_forward.1} parent=1 // pred_check
      _
    $region71: #{mine_forward.1} parent=1 // pred_check_branch
      %2508 = sbr.rel (0) target = $region73
    $region72: #{mine_forward.1} parent=1 // pred_region
      %2509 = dma.done [#allocation5], 16
    $region73: #{mine_forward.1} parent=1 // pred_fallthru
      _
    // Predicated region
    $region74: #{mine_forward.1} parent=1 // pred_check
      _
    $region75: #{mine_forward.1} parent=1 // pred_check_branch
      %2511 = sbr.rel (0) target = $region77
    $region76: #{mine_forward.1} parent=1 // pred_region
      %2512 = dma.done [#allocation10], 16
    $region77: #{mine_forward.1} parent=1 // pred_fallthru
      _
    // Predicated region
    $region78: #{mine_forward.1} parent=1 // pred_check
      _
    $region79: #{mine_forward.1} parent=1 // pred_check_branch
      %2514 = sbr.rel (0) target = $region81
    $region80: #{mine_forward.1} parent=1 // pred_region
      %2515 = dma.done [#allocation10], 16
    $region81: #{mine_forward.1} parent=1 // pred_fallthru
      _
    %2516 = vsyncpa [#allocation4], 1
    %2517 = vsyncpa [#allocation7], 1
    %2518 = vsyncpa [#allocation5], 1
    %2519 = vsyncpa [#allocation10], 1

</llo_original>
